<compile_context>
chip_gen: v7x
topology: tpu7x:2x2x1
jax: 0.10.0
libtpu: 0.0.40
codegen_flags: <defaults>
</compile_context>

<pallas_src>
import numpy as np
import jax
import jax.numpy as jnp
from jax import lax
from jax.experimental import pallas as pl
from jax.experimental.pallas import tpu as pltpu


def _lstm_recurrent_kernel(bs_ref, g_ref, whh_ref, y_ref, h_sc, c_sc):
    """bs_ref:  (T_pad,) int32 in SMEM  -- packed-sequence batch sizes per step
       g_ref:   (TB, N, 4H) f32         -- precomputed LN(x)@W_ih^T + bias
       whh_ref: (H, 4H) bf16            -- recurrent weights (transposed)
       y_ref:   (TB, N, H) f32          -- output block
       h_sc/c_sc: (N, H) f32 VMEM       -- LSTM state carried across grid steps
    """
    blk = pl.program_id(0)

    @pl.when(blk == 0)
    def _():
        h_sc[...] = jnp.zeros_like(h_sc)
        c_sc[...] = jnp.zeros_like(c_sc)

    tb_steps, n, _ = g_ref.shape
    hsz = h_sc.shape[-1]

    # Hoisted (loop-invariant) loads / constants.
    whh = whh_ref[...]                                        # (H, 4H) bf16
    g_blk = g_ref[...]                                        # (TB, N, 4H) f32
    row_ids = lax.broadcasted_iota(jnp.int32, (n, 1), 0)      # (N, 1)

    h = h_sc[...]
    c = c_sc[...]
    # Statically unrolled inner loop over TB timesteps (static indexing, LLO
    # scheduler sees the whole block).
    for tb in range(tb_steps):
        t = blk * tb_steps + tb
        gates = g_blk[tb] + jnp.dot(h.astype(jnp.bfloat16), whh,
                                    preferred_element_type=jnp.float32)
        # Gate columns reordered to (i, f, o, g): one sigmoid over (N, 3H).
        sig = jax.nn.sigmoid(gates[:, :3 * hsz])
        i_g = sig[:, 0 * hsz:1 * hsz]
        f_g = sig[:, 1 * hsz:2 * hsz]
        o_g = sig[:, 2 * hsz:3 * hsz]
        g_g = jnp.tanh(gates[:, 3 * hsz:4 * hsz])

        c_new = f_g * c + i_g * g_g
        h_new = o_g * jnp.tanh(c_new)

        # packed-sequence semantics: rows >= batch_size(t) are past their
        # length -> freeze state, emit zeros (lengths are sorted descending).
        valid = row_ids < bs_ref[t]                           # (N, 1) bool
        c = jnp.where(valid, c_new, c)
        h = jnp.where(valid, h_new, h)
        y_ref[tb] = jnp.where(valid, h_new, 0.0).astype(y_ref.dtype)

    h_sc[...] = h
    c_sc[...] = c


def _reorder_ifgo_to_ifog(p):
    """PyTorch LSTM params are stacked (i, f, g, o) along dim 0 -> (i, f, o, g)."""
    i, f, g, o = jnp.split(p, 4, axis=0)
    return jnp.concatenate([i, f, o, g], axis=0)


def batch_rnn_forward(x, seq_lens, w_ih, w_hh, b_ih, b_hh, *, tb=8):
    """x: (N, T, D) batch_first.  seq_lens: (N,) ints, sorted descending.
    w_ih: (4H, D), w_hh: (4H, H), b_ih/b_hh: (4H,)  (PyTorch LSTM shapes).
    Returns (N, max(seq_lens), H) f32."""
    N, T, D = x.shape
    H = w_hh.shape[1]

    lens_np = np.asarray(seq_lens)
    t_out = int(lens_np.max())
    n_blocks = int(pl.cdiv(t_out, tb))
    t_pad = n_blocks * tb

    # ---- SequenceWise(LayerNorm(D, elementwise_affine=False)), hoisted ----
    xf = jnp.asarray(x, jnp.float32)[:, :t_out, :]
    mu = jnp.mean(xf, axis=-1, keepdims=True)
    var = jnp.mean(jnp.square(xf - mu), axis=-1, keepdims=True)
    xn = (xf - mu) * lax.rsqrt(var + 1e-5)

    # ---- gate-column reorder + hoisted input projection (big matmul) ----
    w_ih_r = _reorder_ifgo_to_ifog(jnp.asarray(w_ih, jnp.float32))
    w_hh_r = _reorder_ifgo_to_ifog(jnp.asarray(w_hh, jnp.float32))
    bias_r = _reorder_ifgo_to_ifog(jnp.asarray(b_ih, jnp.float32)
                                   + jnp.asarray(b_hh, jnp.float32))

    # (N, t_out, D) x (4H, D) -> time-major (t_out, N, 4H); bf16 MXU, f32 acc.
    gates_in = jnp.einsum('ntd,gd->tng',
                          xn.astype(jnp.bfloat16),
                          w_ih_r.astype(jnp.bfloat16),
                          preferred_element_type=jnp.float32)
    gates_in = gates_in + bias_r[None, None, :]
    gates_in = jnp.pad(gates_in, ((0, t_pad - t_out), (0, 0), (0, 0)))

    whh_t = jnp.transpose(w_hh_r).astype(jnp.bfloat16)        # (H, 4H)

    # packed-sequence batch sizes per timestep (scalar-prefetched into SMEM)
    lens = jnp.asarray(lens_np, jnp.int32)
    batch_sizes = jnp.sum(
        lens[None, :] > jnp.arange(t_pad, dtype=jnp.int32)[:, None],
        axis=1).astype(jnp.int32)                             # (t_pad,)

    y_tnh = pl.pallas_call(
        _lstm_recurrent_kernel,
        out_shape=jax.ShapeDtypeStruct((t_pad, N, H), jnp.float32),
        grid_spec=pltpu.PrefetchScalarGridSpec(
            num_scalar_prefetch=1,                            # batch_sizes -> SMEM
            grid=(n_blocks,),
            in_specs=[
                pl.BlockSpec((tb, N, 4 * H), lambda i, bs: (i, 0, 0)),
                pl.BlockSpec((H, 4 * H), lambda i, bs: (0, 0)),
            ],
            out_specs=pl.BlockSpec((tb, N, H), lambda i, bs: (i, 0, 0)),
            scratch_shapes=[
                pltpu.VMEM((N, H), jnp.float32),              # h state
                pltpu.VMEM((N, H), jnp.float32),              # c state
            ],
        ),
        compiler_params=pltpu.CompilerParams(
            dimension_semantics=("arbitrary",)),              # serial recurrence
    )(batch_sizes, gates_in, whh_t)

    # pad_packed_sequence(batch_first=True): (N, t_out, H)
    return jnp.transpose(y_tnh[:t_out], (1, 0, 2))


def _reference(x, seq_lens, w_ih, w_hh, b_ih, b_hh):
    """Pure-JAX f32 reference (LayerNorm + LSTM + packed-sequence masking)."""
    N, T, D = x.shape
    H = w_hh.shape[1]
    mu = jnp.mean(x, axis=-1, keepdims=True)
    var = jnp.mean((x - mu) ** 2, axis=-1, keepdims=True)
    xn = (x - mu) * lax.rsqrt(var + 1e-5)

    def step(carry, xt_and_t):
        h, c = carry
        xt, t = xt_and_t
        gates = xt @ w_ih.T + h @ w_hh.T + b_ih + b_hh
        i, f, g, o = jnp.split(gates, 4, axis=-1)
        i, f, o = jax.nn.sigmoid(i), jax.nn.sigmoid(f), jax.nn.sigmoid(o)
        g = jnp.tanh(g)
        c_new = f * c + i * g
        h_new = o * jnp.tanh(c_new)
        valid = (jnp.asarray(seq_lens)[:, None] > t)
        c = jnp.where(valid, c_new, c)
        h = jnp.where(valid, h_new, h)
        y = jnp.where(valid, h_new, 0.0)
        return (h, c), y

    init = (jnp.zeros((N, H)), jnp.zeros((N, H)))
    _, ys = lax.scan(step, init, (jnp.transpose(xn, (1, 0, 2)), jnp.arange(T)))
    y = jnp.transpose(ys, (1, 0, 2))
    return y[:, :int(np.max(np.asarray(seq_lens))), :]


if __name__ == "__main__":
    # Small shapes: batch N=4, seq T=16, input_size D=32, hidden_size H=32.
    N, T, D, H = 4, 16, 32, 32
    key = jax.random.PRNGKey(0)
    kx, k1, k2, k3, k4 = jax.random.split(key, 5)

    x = jax.random.normal(kx, (N, T, D), jnp.float32)
    # pack_padded_sequence (enforce_sorted default) -> lengths sorted descending.
    seq_lens = np.array([16, 12, 8, 5], dtype=np.int32)

    bound = 1.0 / np.sqrt(H)  # PyTorch LSTM default init range
    w_ih = jax.random.uniform(k1, (4 * H, D), jnp.float32, -bound, bound)
    w_hh = jax.random.uniform(k2, (4 * H, H), jnp.float32, -bound, bound)
    b_ih = jax.random.uniform(k3, (4 * H,), jnp.float32, -bound, bound)
    b_hh = jax.random.uniform(k4, (4 * H,), jnp.float32, -bound, bound)

    # TODO(synk): bidirectional=True path (reverse-direction LSTM + sum) not
    # implemented; module default is bidirectional=False.

    y = batch_rnn_forward(x, seq_lens, w_ih, w_hh, b_ih, b_hh, tb=8)
    y = jax.block_until_ready(y)

    y_ref = jax.block_until_ready(_reference(x, seq_lens, w_ih, w_hh, b_ih, b_hh))
    # bf16 MXU operands (f32 accumulation / f32 state) vs. an all-f32
    # reference -> loosened tolerance; real bugs would show up at O(0.1-1).
    np.testing.assert_allclose(np.asarray(y), np.asarray(y_ref),
                               rtol=2e-2, atol=2e-2)
    print("KERNEL_OK")
</pallas_src>

<mosaic_0001>
module attributes {stable_mosaic.version = 11 : i64} {
  func.func @_lstm_recurrent_kernel(%arg0: i32, %arg1: memref<16xi32, #tpu.memory_space<smem>>, %arg2: memref<8x4x128xf32, #tpu.memory_space<vmem>>, %arg3: memref<32x128xbf16, #tpu.memory_space<vmem>>, %arg4: memref<8x4x32xf32, #tpu.memory_space<vmem>>, %arg5: memref<4x32xf32, #tpu.memory_space<vmem>>, %arg6: memref<4x32xf32, #tpu.memory_space<vmem>>) attributes {dimension_semantics = [#tpu.dimension_semantics<arbitrary>], iteration_bounds = array<i64: 2>, scalar_prefetch = 1 : i64, scratch_operands = 2 : i64, tpu.core_type = #tpu.core_type<tc>, window_params = [{transform_indices = @transform_0, window_bounds = array<i64: 8, 4, 128>}, {pipeline_mode = #tpu.pipeline_mode<synchronous>, transform_indices = @transform_1, window_bounds = array<i64: 32, 128>}, {transform_indices = @transform_2, window_bounds = array<i64: 8, 4, 32>}]} {
    %c0_i32 = arith.constant 0 : i32
    %0 = arith.cmpi eq, %arg0, %c0_i32 : i32
    %1 = arith.extui %0 : i1 to i32
    %c0_i32_0 = arith.constant 0 : i32
    %2 = arith.cmpi ne, %1, %c0_i32_0 : i32
    scf.if %2 {
      %cst_61 = arith.constant 0.000000e+00 : f32
      %330 = vector.broadcast %cst_61 : f32 to vector<4x32xf32>
      %c0_62 = arith.constant 0 : index
      %c0_63 = arith.constant 0 : index
      %331 = vector.load %arg5[%c0_62, %c0_63] : memref<4x32xf32, #tpu.memory_space<vmem>>, vector<4x32xf32>
      tpu.vector_store %arg5[%c0_62, %c0_63], %330 {strides = array<i32>} : memref<4x32xf32, #tpu.memory_space<vmem>>, vector<4x32xf32>,
      %cst_64 = arith.constant 0.000000e+00 : f32
      %332 = vector.broadcast %cst_64 : f32 to vector<4x32xf32>
      %c0_65 = arith.constant 0 : index
      %c0_66 = arith.constant 0 : index
      %333 = vector.load %arg6[%c0_65, %c0_66] : memref<4x32xf32, #tpu.memory_space<vmem>>, vector<4x32xf32>
      tpu.vector_store %arg6[%c0_65, %c0_66], %332 {strides = array<i32>} : memref<4x32xf32, #tpu.memory_space<vmem>>, vector<4x32xf32>,
    } else {
    }
    %c0 = arith.constant 0 : index
    %c0_1 = arith.constant 0 : index
    %3 = vector.load %arg3[%c0, %c0_1] : memref<32x128xbf16, #tpu.memory_space<vmem>>, vector<32x128xbf16>
    %c0_2 = arith.constant 0 : index
    %c0_3 = arith.constant 0 : index
    %c0_4 = arith.constant 0 : index
    %4 = vector.load %arg2[%c0_2, %c0_3, %c0_4] : memref<8x4x128xf32, #tpu.memory_space<vmem>>, vector<8x4x128xf32>
    %5 = tpu.iota {dimensions = array<i32: 0>} : vector<4x1xi32>
    %c0_5 = arith.constant 0 : index
    %c0_6 = arith.constant 0 : index
    %6 = vector.load %arg5[%c0_5, %c0_6] : memref<4x32xf32, #tpu.memory_space<vmem>>, vector<4x32xf32>
    %c0_7 = arith.constant 0 : index
    %c0_8 = arith.constant 0 : index
    %7 = vector.load %arg6[%c0_7, %c0_8] : memref<4x32xf32, #tpu.memory_space<vmem>>, vector<4x32xf32>
    %c8_i32 = arith.constant 8 : i32
    %8 = arith.muli %arg0, %c8_i32 : i32
    %c0_i32_9 = arith.constant 0 : i32
    %9 = arith.addi %8, %c0_i32_9 : i32
    %10 = vector.extract_strided_slice %4 {offsets = [0, 0, 0], sizes = [1, 4, 128], strides = [1, 1, 1]} : vector<8x4x128xf32> to vector<1x4x128xf32>
    %11 = vector.shape_cast %10 : vector<1x4x128xf32> to vector<4x128xf32>
    %12 = arith.truncf %6 : vector<4x32xf32> to vector<4x32xbf16>
    %cst = arith.constant dense<0.000000e+00> : vector<4x128xf32>
    %13 = tpu.matmul %12, %3, %cst {dimension_numbers = #tpu.dot_dimension_numbers<[1], [0], [0], [1], [0, 0, 1, 1], [], []>} : vector<4x32xbf16>, vector<32x128xbf16>, vector<4x128xf32> -> vector<4x128xf32>
    %14 = arith.addf %11, %13 : vector<4x128xf32>
    %15 = vector.extract_strided_slice %14 {offsets = [0, 0], sizes = [4, 96], strides = [1, 1]} : vector<4x128xf32> to vector<4x96xf32>
    %16 = arith.negf %15 : vector<4x96xf32>
    %17 = math.exp %16 : vector<4x96xf32>
    %cst_10 = arith.constant 1.000000e+00 : f32
    %18 = vector.broadcast %cst_10 : f32 to vector<4x96xf32>
    %19 = arith.addf %18, %17 : vector<4x96xf32>
    %20 = arith.divf %18, %19 : vector<4x96xf32>
    %21 = vector.extract_strided_slice %20 {offsets = [0, 0], sizes = [4, 32], strides = [1, 1]} : vector<4x96xf32> to vector<4x32xf32>
    %22 = vector.extract_strided_slice %20 {offsets = [0, 32], sizes = [4, 32], strides = [1, 1]} : vector<4x96xf32> to vector<4x32xf32>
    %23 = vector.extract_strided_slice %20 {offsets = [0, 64], sizes = [4, 32], strides = [1, 1]} : vector<4x96xf32> to vector<4x32xf32>
    %24 = vector.extract_strided_slice %14 {offsets = [0, 96], sizes = [4, 32], strides = [1, 1]} : vector<4x128xf32> to vector<4x32xf32>
    %25 = math.tanh %24 : vector<4x32xf32>
    %26 = arith.mulf %22, %7 : vector<4x32xf32>
    %27 = arith.mulf %21, %25 : vector<4x32xf32>
    %28 = arith.addf %26, %27 : vector<4x32xf32>
    %29 = math.tanh %28 : vector<4x32xf32>
    %30 = arith.mulf %23, %29 : vector<4x32xf32>
    %31 = arith.index_cast %9 : i32 to index
    %32 = memref.load %arg1[%31] : memref<16xi32, #tpu.memory_space<smem>>
    %33 = vector.broadcast %32 : i32 to vector<4x1xi32>
    %34 = arith.cmpi slt, %5, %33 : vector<4x1xi32>
    %35 = vector.shape_cast %34 : vector<4x1xi1> to vector<4x1xi1>
    %36 = vector.broadcast %35 : vector<4x1xi1> to vector<4x32xi1>
    %37 = arith.select %36, %28, %7 : vector<4x32xi1>, vector<4x32xf32>
    %38 = vector.shape_cast %34 : vector<4x1xi1> to vector<4x1xi1>
    %39 = vector.broadcast %38 : vector<4x1xi1> to vector<4x32xi1>
    %40 = arith.select %39, %30, %6 : vector<4x32xi1>, vector<4x32xf32>
    %cst_11 = arith.constant 0.000000e+00 : f32
    %41 = vector.shape_cast %34 : vector<4x1xi1> to vector<4x1xi1>
    %42 = vector.broadcast %41 : vector<4x1xi1> to vector<4x32xi1>
    %43 = vector.broadcast %cst_11 : f32 to vector<4x32xf32>
    %44 = arith.select %42, %30, %43 : vector<4x32xi1>, vector<4x32xf32>
    %c0_12 = arith.constant 0 : index
    %c0_13 = arith.constant 0 : index
    %c0_14 = arith.constant 0 : index
    %45 = vector.load %arg4[%c0_12, %c0_13, %c0_14] : memref<8x4x32xf32, #tpu.memory_space<vmem>>, vector<1x4x32xf32>
    %46 = vector.shape_cast %45 : vector<1x4x32xf32> to vector<4x32xf32>
    %47 = vector.shape_cast %44 : vector<4x32xf32> to vector<1x4x32xf32>
    tpu.vector_store %arg4[%c0_12, %c0_13, %c0_14], %47 {strides = array<i32>} : memref<8x4x32xf32, #tpu.memory_space<vmem>>, vector<1x4x32xf32>,
    %c8_i32_15 = arith.constant 8 : i32
    %48 = arith.muli %arg0, %c8_i32_15 : i32
    %c1_i32 = arith.constant 1 : i32
    %49 = arith.addi %48, %c1_i32 : i32
    %50 = vector.extract_strided_slice %4 {offsets = [1, 0, 0], sizes = [1, 4, 128], strides = [1, 1, 1]} : vector<8x4x128xf32> to vector<1x4x128xf32>
    %51 = vector.shape_cast %50 : vector<1x4x128xf32> to vector<4x128xf32>
    %52 = arith.truncf %40 : vector<4x32xf32> to vector<4x32xbf16>
    %cst_16 = arith.constant dense<0.000000e+00> : vector<4x128xf32>
    %53 = tpu.matmul %52, %3, %cst_16 {dimension_numbers = #tpu.dot_dimension_numbers<[1], [0], [0], [1], [0, 0, 1, 1], [], []>} : vector<4x32xbf16>, vector<32x128xbf16>, vector<4x128xf32> -> vector<4x128xf32>
    %54 = arith.addf %51, %53 : vector<4x128xf32>
    %55 = vector.extract_strided_slice %54 {offsets = [0, 0], sizes = [4, 96], strides = [1, 1]} : vector<4x128xf32> to vector<4x96xf32>
    %56 = arith.negf %55 : vector<4x96xf32>
    %57 = math.exp %56 : vector<4x96xf32>
    %cst_17 = arith.constant 1.000000e+00 : f32
    %58 = vector.broadcast %cst_17 : f32 to vector<4x96xf32>
    %59 = arith.addf %58, %57 : vector<4x96xf32>
    %60 = arith.divf %58, %59 : vector<4x96xf32>
    %61 = vector.extract_strided_slice %60 {offsets = [0, 0], sizes = [4, 32], strides = [1, 1]} : vector<4x96xf32> to vector<4x32xf32>
    %62 = vector.extract_strided_slice %60 {offsets = [0, 32], sizes = [4, 32], strides = [1, 1]} : vector<4x96xf32> to vector<4x32xf32>
    %63 = vector.extract_strided_slice %60 {offsets = [0, 64], sizes = [4, 32], strides = [1, 1]} : vector<4x96xf32> to vector<4x32xf32>
    %64 = vector.extract_strided_slice %54 {offsets = [0, 96], sizes = [4, 32], strides = [1, 1]} : vector<4x128xf32> to vector<4x32xf32>
    %65 = math.tanh %64 : vector<4x32xf32>
    %66 = arith.mulf %62, %37 : vector<4x32xf32>
    %67 = arith.mulf %61, %65 : vector<4x32xf32>
    %68 = arith.addf %66, %67 : vector<4x32xf32>
    %69 = math.tanh %68 : vector<4x32xf32>
    %70 = arith.mulf %63, %69 : vector<4x32xf32>
    %71 = arith.index_cast %49 : i32 to index
    %72 = memref.load %arg1[%71] : memref<16xi32, #tpu.memory_space<smem>>
    %73 = vector.broadcast %72 : i32 to vector<4x1xi32>
    %74 = arith.cmpi slt, %5, %73 : vector<4x1xi32>
    %75 = vector.shape_cast %74 : vector<4x1xi1> to vector<4x1xi1>
    %76 = vector.broadcast %75 : vector<4x1xi1> to vector<4x32xi1>
    %77 = arith.select %76, %68, %37 : vector<4x32xi1>, vector<4x32xf32>
    %78 = vector.shape_cast %74 : vector<4x1xi1> to vector<4x1xi1>
    %79 = vector.broadcast %78 : vector<4x1xi1> to vector<4x32xi1>
    %80 = arith.select %79, %70, %40 : vector<4x32xi1>, vector<4x32xf32>
    %cst_18 = arith.constant 0.000000e+00 : f32
    %81 = vector.shape_cast %74 : vector<4x1xi1> to vector<4x1xi1>
    %82 = vector.broadcast %81 : vector<4x1xi1> to vector<4x32xi1>
    %83 = vector.broadcast %cst_18 : f32 to vector<4x32xf32>
    %84 = arith.select %82, %70, %83 : vector<4x32xi1>, vector<4x32xf32>
    %c1 = arith.constant 1 : index
    %c0_19 = arith.constant 0 : index
    %c0_20 = arith.constant 0 : index
    %85 = vector.load %arg4[%c1, %c0_19, %c0_20] : memref<8x4x32xf32, #tpu.memory_space<vmem>>, vector<1x4x32xf32>
    %86 = vector.shape_cast %85 : vector<1x4x32xf32> to vector<4x32xf32>
    %87 = vector.shape_cast %84 : vector<4x32xf32> to vector<1x4x32xf32>
    tpu.vector_store %arg4[%c1, %c0_19, %c0_20], %87 {strides = array<i32>} : memref<8x4x32xf32, #tpu.memory_space<vmem>>, vector<1x4x32xf32>,
    %c8_i32_21 = arith.constant 8 : i32
    %88 = arith.muli %arg0, %c8_i32_21 : i32
    %c2_i32 = arith.constant 2 : i32
    %89 = arith.addi %88, %c2_i32 : i32
    %90 = vector.extract_strided_slice %4 {offsets = [2, 0, 0], sizes = [1, 4, 128], strides = [1, 1, 1]} : vector<8x4x128xf32> to vector<1x4x128xf32>
    %91 = vector.shape_cast %90 : vector<1x4x128xf32> to vector<4x128xf32>
    %92 = arith.truncf %80 : vector<4x32xf32> to vector<4x32xbf16>
    %cst_22 = arith.constant dense<0.000000e+00> : vector<4x128xf32>
    %93 = tpu.matmul %92, %3, %cst_22 {dimension_numbers = #tpu.dot_dimension_numbers<[1], [0], [0], [1], [0, 0, 1, 1], [], []>} : vector<4x32xbf16>, vector<32x128xbf16>, vector<4x128xf32> -> vector<4x128xf32>
    %94 = arith.addf %91, %93 : vector<4x128xf32>
    %95 = vector.extract_strided_slice %94 {offsets = [0, 0], sizes = [4, 96], strides = [1, 1]} : vector<4x128xf32> to vector<4x96xf32>
    %96 = arith.negf %95 : vector<4x96xf32>
    %97 = math.exp %96 : vector<4x96xf32>
    %cst_23 = arith.constant 1.000000e+00 : f32
    %98 = vector.broadcast %cst_23 : f32 to vector<4x96xf32>
    %99 = arith.addf %98, %97 : vector<4x96xf32>
    %100 = arith.divf %98, %99 : vector<4x96xf32>
    %101 = vector.extract_strided_slice %100 {offsets = [0, 0], sizes = [4, 32], strides = [1, 1]} : vector<4x96xf32> to vector<4x32xf32>
    %102 = vector.extract_strided_slice %100 {offsets = [0, 32], sizes = [4, 32], strides = [1, 1]} : vector<4x96xf32> to vector<4x32xf32>
    %103 = vector.extract_strided_slice %100 {offsets = [0, 64], sizes = [4, 32], strides = [1, 1]} : vector<4x96xf32> to vector<4x32xf32>
    %104 = vector.extract_strided_slice %94 {offsets = [0, 96], sizes = [4, 32], strides = [1, 1]} : vector<4x128xf32> to vector<4x32xf32>
    %105 = math.tanh %104 : vector<4x32xf32>
    %106 = arith.mulf %102, %77 : vector<4x32xf32>
    %107 = arith.mulf %101, %105 : vector<4x32xf32>
    %108 = arith.addf %106, %107 : vector<4x32xf32>
    %109 = math.tanh %108 : vector<4x32xf32>
    %110 = arith.mulf %103, %109 : vector<4x32xf32>
    %111 = arith.index_cast %89 : i32 to index
    %112 = memref.load %arg1[%111] : memref<16xi32, #tpu.memory_space<smem>>
    %113 = vector.broadcast %112 : i32 to vector<4x1xi32>
    %114 = arith.cmpi slt, %5, %113 : vector<4x1xi32>
    %115 = vector.shape_cast %114 : vector<4x1xi1> to vector<4x1xi1>
    %116 = vector.broadcast %115 : vector<4x1xi1> to vector<4x32xi1>
    %117 = arith.select %116, %108, %77 : vector<4x32xi1>, vector<4x32xf32>
    %118 = vector.shape_cast %114 : vector<4x1xi1> to vector<4x1xi1>
    %119 = vector.broadcast %118 : vector<4x1xi1> to vector<4x32xi1>
    %120 = arith.select %119, %110, %80 : vector<4x32xi1>, vector<4x32xf32>
    %cst_24 = arith.constant 0.000000e+00 : f32
    %121 = vector.shape_cast %114 : vector<4x1xi1> to vector<4x1xi1>
    %122 = vector.broadcast %121 : vector<4x1xi1> to vector<4x32xi1>
    %123 = vector.broadcast %cst_24 : f32 to vector<4x32xf32>
    %124 = arith.select %122, %110, %123 : vector<4x32xi1>, vector<4x32xf32>
    %c2 = arith.constant 2 : index
    %c0_25 = arith.constant 0 : index
    %c0_26 = arith.constant 0 : index
    %125 = vector.load %arg4[%c2, %c0_25, %c0_26] : memref<8x4x32xf32, #tpu.memory_space<vmem>>, vector<1x4x32xf32>
    %126 = vector.shape_cast %125 : vector<1x4x32xf32> to vector<4x32xf32>
    %127 = vector.shape_cast %124 : vector<4x32xf32> to vector<1x4x32xf32>
    tpu.vector_store %arg4[%c2, %c0_25, %c0_26], %127 {strides = array<i32>} : memref<8x4x32xf32, #tpu.memory_space<vmem>>, vector<1x4x32xf32>,
    %c8_i32_27 = arith.constant 8 : i32
    %128 = arith.muli %arg0, %c8_i32_27 : i32
    %c3_i32 = arith.constant 3 : i32
    %129 = arith.addi %128, %c3_i32 : i32
    %130 = vector.extract_strided_slice %4 {offsets = [3, 0, 0], sizes = [1, 4, 128], strides = [1, 1, 1]} : vector<8x4x128xf32> to vector<1x4x128xf32>
    %131 = vector.shape_cast %130 : vector<1x4x128xf32> to vector<4x128xf32>
    %132 = arith.truncf %120 : vector<4x32xf32> to vector<4x32xbf16>
    %cst_28 = arith.constant dense<0.000000e+00> : vector<4x128xf32>
    %133 = tpu.matmul %132, %3, %cst_28 {dimension_numbers = #tpu.dot_dimension_numbers<[1], [0], [0], [1], [0, 0, 1, 1], [], []>} : vector<4x32xbf16>, vector<32x128xbf16>, vector<4x128xf32> -> vector<4x128xf32>
    %134 = arith.addf %131, %133 : vector<4x128xf32>
    %135 = vector.extract_strided_slice %134 {offsets = [0, 0], sizes = [4, 96], strides = [1, 1]} : vector<4x128xf32> to vector<4x96xf32>
    %136 = arith.negf %135 : vector<4x96xf32>
    %137 = math.exp %136 : vector<4x96xf32>
    %cst_29 = arith.constant 1.000000e+00 : f32
    %138 = vector.broadcast %cst_29 : f32 to vector<4x96xf32>
    %139 = arith.addf %138, %137 : vector<4x96xf32>
    %140 = arith.divf %138, %139 : vector<4x96xf32>
    %141 = vector.extract_strided_slice %140 {offsets = [0, 0], sizes = [4, 32], strides = [1, 1]} : vector<4x96xf32> to vector<4x32xf32>
    %142 = vector.extract_strided_slice %140 {offsets = [0, 32], sizes = [4, 32], strides = [1, 1]} : vector<4x96xf32> to vector<4x32xf32>
    %143 = vector.extract_strided_slice %140 {offsets = [0, 64], sizes = [4, 32], strides = [1, 1]} : vector<4x96xf32> to vector<4x32xf32>
    %144 = vector.extract_strided_slice %134 {offsets = [0, 96], sizes = [4, 32], strides = [1, 1]} : vector<4x128xf32> to vector<4x32xf32>
    %145 = math.tanh %144 : vector<4x32xf32>
    %146 = arith.mulf %142, %117 : vector<4x32xf32>
    %147 = arith.mulf %141, %145 : vector<4x32xf32>
    %148 = arith.addf %146, %147 : vector<4x32xf32>
    %149 = math.tanh %148 : vector<4x32xf32>
    %150 = arith.mulf %143, %149 : vector<4x32xf32>
    %151 = arith.index_cast %129 : i32 to index
    %152 = memref.load %arg1[%151] : memref<16xi32, #tpu.memory_space<smem>>
    %153 = vector.broadcast %152 : i32 to vector<4x1xi32>
    %154 = arith.cmpi slt, %5, %153 : vector<4x1xi32>
    %155 = vector.shape_cast %154 : vector<4x1xi1> to vector<4x1xi1>
    %156 = vector.broadcast %155 : vector<4x1xi1> to vector<4x32xi1>
    %157 = arith.select %156, %148, %117 : vector<4x32xi1>, vector<4x32xf32>
    %158 = vector.shape_cast %154 : vector<4x1xi1> to vector<4x1xi1>
    %159 = vector.broadcast %158 : vector<4x1xi1> to vector<4x32xi1>
    %160 = arith.select %159, %150, %120 : vector<4x32xi1>, vector<4x32xf32>
    %cst_30 = arith.constant 0.000000e+00 : f32
    %161 = vector.shape_cast %154 : vector<4x1xi1> to vector<4x1xi1>
    %162 = vector.broadcast %161 : vector<4x1xi1> to vector<4x32xi1>
    %163 = vector.broadcast %cst_30 : f32 to vector<4x32xf32>
    %164 = arith.select %162, %150, %163 : vector<4x32xi1>, vector<4x32xf32>
    %c3 = arith.constant 3 : index
    %c0_31 = arith.constant 0 : index
    %c0_32 = arith.constant 0 : index
    %165 = vector.load %arg4[%c3, %c0_31, %c0_32] : memref<8x4x32xf32, #tpu.memory_space<vmem>>, vector<1x4x32xf32>
    %166 = vector.shape_cast %165 : vector<1x4x32xf32> to vector<4x32xf32>
    %167 = vector.shape_cast %164 : vector<4x32xf32> to vector<1x4x32xf32>
    tpu.vector_store %arg4[%c3, %c0_31, %c0_32], %167 {strides = array<i32>} : memref<8x4x32xf32, #tpu.memory_space<vmem>>, vector<1x4x32xf32>,
    %c8_i32_33 = arith.constant 8 : i32
    %168 = arith.muli %arg0, %c8_i32_33 : i32
    %c4_i32 = arith.constant 4 : i32
    %169 = arith.addi %168, %c4_i32 : i32
    %170 = vector.extract_strided_slice %4 {offsets = [4, 0, 0], sizes = [1, 4, 128], strides = [1, 1, 1]} : vector<8x4x128xf32> to vector<1x4x128xf32>
    %171 = vector.shape_cast %170 : vector<1x4x128xf32> to vector<4x128xf32>
    %172 = arith.truncf %160 : vector<4x32xf32> to vector<4x32xbf16>
    %cst_34 = arith.constant dense<0.000000e+00> : vector<4x128xf32>
    %173 = tpu.matmul %172, %3, %cst_34 {dimension_numbers = #tpu.dot_dimension_numbers<[1], [0], [0], [1], [0, 0, 1, 1], [], []>} : vector<4x32xbf16>, vector<32x128xbf16>, vector<4x128xf32> -> vector<4x128xf32>
    %174 = arith.addf %171, %173 : vector<4x128xf32>
    %175 = vector.extract_strided_slice %174 {offsets = [0, 0], sizes = [4, 96], strides = [1, 1]} : vector<4x128xf32> to vector<4x96xf32>
    %176 = arith.negf %175 : vector<4x96xf32>
    %177 = math.exp %176 : vector<4x96xf32>
    %cst_35 = arith.constant 1.000000e+00 : f32
    %178 = vector.broadcast %cst_35 : f32 to vector<4x96xf32>
    %179 = arith.addf %178, %177 : vector<4x96xf32>
    %180 = arith.divf %178, %179 : vector<4x96xf32>
    %181 = vector.extract_strided_slice %180 {offsets = [0, 0], sizes = [4, 32], strides = [1, 1]} : vector<4x96xf32> to vector<4x32xf32>
    %182 = vector.extract_strided_slice %180 {offsets = [0, 32], sizes = [4, 32], strides = [1, 1]} : vector<4x96xf32> to vector<4x32xf32>
    %183 = vector.extract_strided_slice %180 {offsets = [0, 64], sizes = [4, 32], strides = [1, 1]} : vector<4x96xf32> to vector<4x32xf32>
    %184 = vector.extract_strided_slice %174 {offsets = [0, 96], sizes = [4, 32], strides = [1, 1]} : vector<4x128xf32> to vector<4x32xf32>
    %185 = math.tanh %184 : vector<4x32xf32>
    %186 = arith.mulf %182, %157 : vector<4x32xf32>
    %187 = arith.mulf %181, %185 : vector<4x32xf32>
    %188 = arith.addf %186, %187 : vector<4x32xf32>
    %189 = math.tanh %188 : vector<4x32xf32>
    %190 = arith.mulf %183, %189 : vector<4x32xf32>
    %191 = arith.index_cast %169 : i32 to index
    %192 = memref.load %arg1[%191] : memref<16xi32, #tpu.memory_space<smem>>
    %193 = vector.broadcast %192 : i32 to vector<4x1xi32>
    %194 = arith.cmpi slt, %5, %193 : vector<4x1xi32>
    %195 = vector.shape_cast %194 : vector<4x1xi1> to vector<4x1xi1>
    %196 = vector.broadcast %195 : vector<4x1xi1> to vector<4x32xi1>
    %197 = arith.select %196, %188, %157 : vector<4x32xi1>, vector<4x32xf32>
    %198 = vector.shape_cast %194 : vector<4x1xi1> to vector<4x1xi1>
    %199 = vector.broadcast %198 : vector<4x1xi1> to vector<4x32xi1>
    %200 = arith.select %199, %190, %160 : vector<4x32xi1>, vector<4x32xf32>
    %cst_36 = arith.constant 0.000000e+00 : f32
    %201 = vector.shape_cast %194 : vector<4x1xi1> to vector<4x1xi1>
    %202 = vector.broadcast %201 : vector<4x1xi1> to vector<4x32xi1>
    %203 = vector.broadcast %cst_36 : f32 to vector<4x32xf32>
    %204 = arith.select %202, %190, %203 : vector<4x32xi1>, vector<4x32xf32>
    %c4 = arith.constant 4 : index
    %c0_37 = arith.constant 0 : index
    %c0_38 = arith.constant 0 : index
    %205 = vector.load %arg4[%c4, %c0_37, %c0_38] : memref<8x4x32xf32, #tpu.memory_space<vmem>>, vector<1x4x32xf32>
    %206 = vector.shape_cast %205 : vector<1x4x32xf32> to vector<4x32xf32>
    %207 = vector.shape_cast %204 : vector<4x32xf32> to vector<1x4x32xf32>
    tpu.vector_store %arg4[%c4, %c0_37, %c0_38], %207 {strides = array<i32>} : memref<8x4x32xf32, #tpu.memory_space<vmem>>, vector<1x4x32xf32>,
    %c8_i32_39 = arith.constant 8 : i32
    %208 = arith.muli %arg0, %c8_i32_39 : i32
    %c5_i32 = arith.constant 5 : i32
    %209 = arith.addi %208, %c5_i32 : i32
    %210 = vector.extract_strided_slice %4 {offsets = [5, 0, 0], sizes = [1, 4, 128], strides = [1, 1, 1]} : vector<8x4x128xf32> to vector<1x4x128xf32>
    %211 = vector.shape_cast %210 : vector<1x4x128xf32> to vector<4x128xf32>
    %212 = arith.truncf %200 : vector<4x32xf32> to vector<4x32xbf16>
    %cst_40 = arith.constant dense<0.000000e+00> : vector<4x128xf32>
    %213 = tpu.matmul %212, %3, %cst_40 {dimension_numbers = #tpu.dot_dimension_numbers<[1], [0], [0], [1], [0, 0, 1, 1], [], []>} : vector<4x32xbf16>, vector<32x128xbf16>, vector<4x128xf32> -> vector<4x128xf32>
    %214 = arith.addf %211, %213 : vector<4x128xf32>
    %215 = vector.extract_strided_slice %214 {offsets = [0, 0], sizes = [4, 96], strides = [1, 1]} : vector<4x128xf32> to vector<4x96xf32>
    %216 = arith.negf %215 : vector<4x96xf32>
    %217 = math.exp %216 : vector<4x96xf32>
    %cst_41 = arith.constant 1.000000e+00 : f32
    %218 = vector.broadcast %cst_41 : f32 to vector<4x96xf32>
    %219 = arith.addf %218, %217 : vector<4x96xf32>
    %220 = arith.divf %218, %219 : vector<4x96xf32>
    %221 = vector.extract_strided_slice %220 {offsets = [0, 0], sizes = [4, 32], strides = [1, 1]} : vector<4x96xf32> to vector<4x32xf32>
    %222 = vector.extract_strided_slice %220 {offsets = [0, 32], sizes = [4, 32], strides = [1, 1]} : vector<4x96xf32> to vector<4x32xf32>
    %223 = vector.extract_strided_slice %220 {offsets = [0, 64], sizes = [4, 32], strides = [1, 1]} : vector<4x96xf32> to vector<4x32xf32>
    %224 = vector.extract_strided_slice %214 {offsets = [0, 96], sizes = [4, 32], strides = [1, 1]} : vector<4x128xf32> to vector<4x32xf32>
    %225 = math.tanh %224 : vector<4x32xf32>
    %226 = arith.mulf %222, %197 : vector<4x32xf32>
    %227 = arith.mulf %221, %225 : vector<4x32xf32>
    %228 = arith.addf %226, %227 : vector<4x32xf32>
    %229 = math.tanh %228 : vector<4x32xf32>
    %230 = arith.mulf %223, %229 : vector<4x32xf32>
    %231 = arith.index_cast %209 : i32 to index
    %232 = memref.load %arg1[%231] : memref<16xi32, #tpu.memory_space<smem>>
    %233 = vector.broadcast %232 : i32 to vector<4x1xi32>
    %234 = arith.cmpi slt, %5, %233 : vector<4x1xi32>
    %235 = vector.shape_cast %234 : vector<4x1xi1> to vector<4x1xi1>
    %236 = vector.broadcast %235 : vector<4x1xi1> to vector<4x32xi1>
    %237 = arith.select %236, %228, %197 : vector<4x32xi1>, vector<4x32xf32>
    %238 = vector.shape_cast %234 : vector<4x1xi1> to vector<4x1xi1>
    %239 = vector.broadcast %238 : vector<4x1xi1> to vector<4x32xi1>
    %240 = arith.select %239, %230, %200 : vector<4x32xi1>, vector<4x32xf32>
    %cst_42 = arith.constant 0.000000e+00 : f32
    %241 = vector.shape_cast %234 : vector<4x1xi1> to vector<4x1xi1>
    %242 = vector.broadcast %241 : vector<4x1xi1> to vector<4x32xi1>
    %243 = vector.broadcast %cst_42 : f32 to vector<4x32xf32>
    %244 = arith.select %242, %230, %243 : vector<4x32xi1>, vector<4x32xf32>
    %c5 = arith.constant 5 : index
    %c0_43 = arith.constant 0 : index
    %c0_44 = arith.constant 0 : index
    %245 = vector.load %arg4[%c5, %c0_43, %c0_44] : memref<8x4x32xf32, #tpu.memory_space<vmem>>, vector<1x4x32xf32>
    %246 = vector.shape_cast %245 : vector<1x4x32xf32> to vector<4x32xf32>
    %247 = vector.shape_cast %244 : vector<4x32xf32> to vector<1x4x32xf32>
    tpu.vector_store %arg4[%c5, %c0_43, %c0_44], %247 {strides = array<i32>} : memref<8x4x32xf32, #tpu.memory_space<vmem>>, vector<1x4x32xf32>,
    %c8_i32_45 = arith.constant 8 : i32
    %248 = arith.muli %arg0, %c8_i32_45 : i32
    %c6_i32 = arith.constant 6 : i32
    %249 = arith.addi %248, %c6_i32 : i32
    %250 = vector.extract_strided_slice %4 {offsets = [6, 0, 0], sizes = [1, 4, 128], strides = [1, 1, 1]} : vector<8x4x128xf32> to vector<1x4x128xf32>
    %251 = vector.shape_cast %250 : vector<1x4x128xf32> to vector<4x128xf32>
    %252 = arith.truncf %240 : vector<4x32xf32> to vector<4x32xbf16>
    %cst_46 = arith.constant dense<0.000000e+00> : vector<4x128xf32>
    %253 = tpu.matmul %252, %3, %cst_46 {dimension_numbers = #tpu.dot_dimension_numbers<[1], [0], [0], [1], [0, 0, 1, 1], [], []>} : vector<4x32xbf16>, vector<32x128xbf16>, vector<4x128xf32> -> vector<4x128xf32>
    %254 = arith.addf %251, %253 : vector<4x128xf32>
    %255 = vector.extract_strided_slice %254 {offsets = [0, 0], sizes = [4, 96], strides = [1, 1]} : vector<4x128xf32> to vector<4x96xf32>
    %256 = arith.negf %255 : vector<4x96xf32>
    %257 = math.exp %256 : vector<4x96xf32>
    %cst_47 = arith.constant 1.000000e+00 : f32
    %258 = vector.broadcast %cst_47 : f32 to vector<4x96xf32>
    %259 = arith.addf %258, %257 : vector<4x96xf32>
    %260 = arith.divf %258, %259 : vector<4x96xf32>
    %261 = vector.extract_strided_slice %260 {offsets = [0, 0], sizes = [4, 32], strides = [1, 1]} : vector<4x96xf32> to vector<4x32xf32>
    %262 = vector.extract_strided_slice %260 {offsets = [0, 32], sizes = [4, 32], strides = [1, 1]} : vector<4x96xf32> to vector<4x32xf32>
    %263 = vector.extract_strided_slice %260 {offsets = [0, 64], sizes = [4, 32], strides = [1, 1]} : vector<4x96xf32> to vector<4x32xf32>
    %264 = vector.extract_strided_slice %254 {offsets = [0, 96], sizes = [4, 32], strides = [1, 1]} : vector<4x128xf32> to vector<4x32xf32>
    %265 = math.tanh %264 : vector<4x32xf32>
    %266 = arith.mulf %262, %237 : vector<4x32xf32>
    %267 = arith.mulf %261, %265 : vector<4x32xf32>
    %268 = arith.addf %266, %267 : vector<4x32xf32>
    %269 = math.tanh %268 : vector<4x32xf32>
    %270 = arith.mulf %263, %269 : vector<4x32xf32>
    %271 = arith.index_cast %249 : i32 to index
    %272 = memref.load %arg1[%271] : memref<16xi32, #tpu.memory_space<smem>>
    %273 = vector.broadcast %272 : i32 to vector<4x1xi32>
    %274 = arith.cmpi slt, %5, %273 : vector<4x1xi32>
    %275 = vector.shape_cast %274 : vector<4x1xi1> to vector<4x1xi1>
    %276 = vector.broadcast %275 : vector<4x1xi1> to vector<4x32xi1>
    %277 = arith.select %276, %268, %237 : vector<4x32xi1>, vector<4x32xf32>
    %278 = vector.shape_cast %274 : vector<4x1xi1> to vector<4x1xi1>
    %279 = vector.broadcast %278 : vector<4x1xi1> to vector<4x32xi1>
    %280 = arith.select %279, %270, %240 : vector<4x32xi1>, vector<4x32xf32>
    %cst_48 = arith.constant 0.000000e+00 : f32
    %281 = vector.shape_cast %274 : vector<4x1xi1> to vector<4x1xi1>
    %282 = vector.broadcast %281 : vector<4x1xi1> to vector<4x32xi1>
    %283 = vector.broadcast %cst_48 : f32 to vector<4x32xf32>
    %284 = arith.select %282, %270, %283 : vector<4x32xi1>, vector<4x32xf32>
    %c6 = arith.constant 6 : index
    %c0_49 = arith.constant 0 : index
    %c0_50 = arith.constant 0 : index
    %285 = vector.load %arg4[%c6, %c0_49, %c0_50] : memref<8x4x32xf32, #tpu.memory_space<vmem>>, vector<1x4x32xf32>
    %286 = vector.shape_cast %285 : vector<1x4x32xf32> to vector<4x32xf32>
    %287 = vector.shape_cast %284 : vector<4x32xf32> to vector<1x4x32xf32>
    tpu.vector_store %arg4[%c6, %c0_49, %c0_50], %287 {strides = array<i32>} : memref<8x4x32xf32, #tpu.memory_space<vmem>>, vector<1x4x32xf32>,
    %c8_i32_51 = arith.constant 8 : i32
    %288 = arith.muli %arg0, %c8_i32_51 : i32
    %c7_i32 = arith.constant 7 : i32
    %289 = arith.addi %288, %c7_i32 : i32
    %290 = vector.extract_strided_slice %4 {offsets = [7, 0, 0], sizes = [1, 4, 128], strides = [1, 1, 1]} : vector<8x4x128xf32> to vector<1x4x128xf32>
    %291 = vector.shape_cast %290 : vector<1x4x128xf32> to vector<4x128xf32>
    %292 = arith.truncf %280 : vector<4x32xf32> to vector<4x32xbf16>
    %cst_52 = arith.constant dense<0.000000e+00> : vector<4x128xf32>
    %293 = tpu.matmul %292, %3, %cst_52 {dimension_numbers = #tpu.dot_dimension_numbers<[1], [0], [0], [1], [0, 0, 1, 1], [], []>} : vector<4x32xbf16>, vector<32x128xbf16>, vector<4x128xf32> -> vector<4x128xf32>
    %294 = arith.addf %291, %293 : vector<4x128xf32>
    %295 = vector.extract_strided_slice %294 {offsets = [0, 0], sizes = [4, 96], strides = [1, 1]} : vector<4x128xf32> to vector<4x96xf32>
    %296 = arith.negf %295 : vector<4x96xf32>
    %297 = math.exp %296 : vector<4x96xf32>
    %cst_53 = arith.constant 1.000000e+00 : f32
    %298 = vector.broadcast %cst_53 : f32 to vector<4x96xf32>
    %299 = arith.addf %298, %297 : vector<4x96xf32>
    %300 = arith.divf %298, %299 : vector<4x96xf32>
    %301 = vector.extract_strided_slice %300 {offsets = [0, 0], sizes = [4, 32], strides = [1, 1]} : vector<4x96xf32> to vector<4x32xf32>
    %302 = vector.extract_strided_slice %300 {offsets = [0, 32], sizes = [4, 32], strides = [1, 1]} : vector<4x96xf32> to vector<4x32xf32>
    %303 = vector.extract_strided_slice %300 {offsets = [0, 64], sizes = [4, 32], strides = [1, 1]} : vector<4x96xf32> to vector<4x32xf32>
    %304 = vector.extract_strided_slice %294 {offsets = [0, 96], sizes = [4, 32], strides = [1, 1]} : vector<4x128xf32> to vector<4x32xf32>
    %305 = math.tanh %304 : vector<4x32xf32>
    %306 = arith.mulf %302, %277 : vector<4x32xf32>
    %307 = arith.mulf %301, %305 : vector<4x32xf32>
    %308 = arith.addf %306, %307 : vector<4x32xf32>
    %309 = math.tanh %308 : vector<4x32xf32>
    %310 = arith.mulf %303, %309 : vector<4x32xf32>
    %311 = arith.index_cast %289 : i32 to index
    %312 = memref.load %arg1[%311] : memref<16xi32, #tpu.memory_space<smem>>
    %313 = vector.broadcast %312 : i32 to vector<4x1xi32>
    %314 = arith.cmpi slt, %5, %313 : vector<4x1xi32>
    %315 = vector.shape_cast %314 : vector<4x1xi1> to vector<4x1xi1>
    %316 = vector.broadcast %315 : vector<4x1xi1> to vector<4x32xi1>
    %317 = arith.select %316, %308, %277 : vector<4x32xi1>, vector<4x32xf32>
    %318 = vector.shape_cast %314 : vector<4x1xi1> to vector<4x1xi1>
    %319 = vector.broadcast %318 : vector<4x1xi1> to vector<4x32xi1>
    %320 = arith.select %319, %310, %280 : vector<4x32xi1>, vector<4x32xf32>
    %cst_54 = arith.constant 0.000000e+00 : f32
    %321 = vector.shape_cast %314 : vector<4x1xi1> to vector<4x1xi1>
    %322 = vector.broadcast %321 : vector<4x1xi1> to vector<4x32xi1>
    %323 = vector.broadcast %cst_54 : f32 to vector<4x32xf32>
    %324 = arith.select %322, %310, %323 : vector<4x32xi1>, vector<4x32xf32>
    %c7 = arith.constant 7 : index
    %c0_55 = arith.constant 0 : index
    %c0_56 = arith.constant 0 : index
    %325 = vector.load %arg4[%c7, %c0_55, %c0_56] : memref<8x4x32xf32, #tpu.memory_space<vmem>>, vector<1x4x32xf32>
    %326 = vector.shape_cast %325 : vector<1x4x32xf32> to vector<4x32xf32>
    %327 = vector.shape_cast %324 : vector<4x32xf32> to vector<1x4x32xf32>
    tpu.vector_store %arg4[%c7, %c0_55, %c0_56], %327 {strides = array<i32>} : memref<8x4x32xf32, #tpu.memory_space<vmem>>, vector<1x4x32xf32>,
    %c0_57 = arith.constant 0 : index
    %c0_58 = arith.constant 0 : index
    %328 = vector.load %arg5[%c0_57, %c0_58] : memref<4x32xf32, #tpu.memory_space<vmem>>, vector<4x32xf32>
    tpu.vector_store %arg5[%c0_57, %c0_58], %320 {strides = array<i32>} : memref<4x32xf32, #tpu.memory_space<vmem>>, vector<4x32xf32>,
    %c0_59 = arith.constant 0 : index
    %c0_60 = arith.constant 0 : index
    %329 = vector.load %arg6[%c0_59, %c0_60] : memref<4x32xf32, #tpu.memory_space<vmem>>, vector<4x32xf32>
    tpu.vector_store %arg6[%c0_59, %c0_60], %317 {strides = array<i32>} : memref<4x32xf32, #tpu.memory_space<vmem>>, vector<4x32xf32>,
    return
  }
  func.func @transform_0(%arg0: i32, %arg1: memref<16xi32, #tpu.memory_space<smem>>) -> (i32, i32, i32) {
    %c0_i32 = arith.constant 0 : i32
    %c0_i32_0 = arith.constant 0 : i32
    %c0_i32_1 = arith.constant 0 : i32
    return %arg0, %c0_i32, %c0_i32_0 : i32, i32, i32
  }
  func.func @transform_1(%arg0: i32, %arg1: memref<16xi32, #tpu.memory_space<smem>>) -> (i32, i32) {
    %c0_i32 = arith.constant 0 : i32
    %c0_i32_0 = arith.constant 0 : i32
    %c0_i32_1 = arith.constant 0 : i32
    return %c0_i32, %c0_i32_0 : i32, i32
  }
  func.func @transform_2(%arg0: i32, %arg1: memref<16xi32, #tpu.memory_space<smem>>) -> (i32, i32, i32) {
    %c0_i32 = arith.constant 0 : i32
    %c0_i32_0 = arith.constant 0 : i32
    %c0_i32_1 = arith.constant 0 : i32
    return %arg0, %c0_i32, %c0_i32_0 : i32, i32, i32
  }
}

</mosaic_0001>

<llo_original>
// kernel: tpu_custom_call.1
$region0: #{tpu_custom_call.1}
  #allocation0 [shape = 'u32[]', space=smem, size = 0x4, offset = 0x4, fixed_abs, tag = 'smem constant byte address 0x4 - core index']
  #allocation1 [shape = 'u32[144,128]{1,0:T(1,128)}', space=vmem, size = 0x12000, scoped, tag = 'internal scratch']
  #allocation2 [shape = 'f32[4,32]{1,0:T(4,128)}', space=vmem, size = 0x800, scoped, tag = 'scratch operand']
  #allocation3 [shape = 'f32[4,32]{1,0:T(4,128)}', space=vmem, size = 0x800, scoped, tag = 'scratch operand']
  #allocation4 [shape = 's32[1]{0}', space=sflag, size = 0x4, scoped, tag = 'scoped memory for tpu_custom_call.1']
  #allocation5 [shape = 'u8[512]{0}', space=smem, size = 0x200, scoped, tag = 'prefetched SMEM operand 0']
  %s0 = inlined_call_operand.hbm [shape: s32[16], index: 0, kind: input, shape index: {}]
  %s1 = inlined_call_operand.hbm [shape: f32[16,4,128], index: 1, kind: input, shape index: {}]
  %s2 = inlined_call_operand.hbm [shape: bf16[32,128], index: 2, kind: input, shape index: {}]
  %s3 = inlined_call_operand.hbm [shape: f32[16,4,32], index: 3, kind: output, shape index: {}]
  %s4 = sld [smem:[#allocation0]]
  $region53: #{tpu_custom_call.1} parent=0
    _
  %s6 = ssub.s32 1, %s4
  %s7 = scalar_select 0, %s6, %s4
  %9 = dma.hbm_to_smem %s0, 16, [#allocation5], [#allocation4]
  %10 = dma.done [#allocation4], 16
  %11 = sfence
  $region1: #{tpu_custom_call.1} parent=0
    #allocation6 [shape = 'u8[32768]{0}', space=vmem, size = 0x8000, scoped, tag = 'input window, operand 1']
    #allocation7 [shape = 's32[2]{0}', space=sflag, size = 0x8, scoped, tag = 'scoped memory for tpu_custom_call.1']
    #allocation8 [shape = 's32[2]{0}', space=sflag, size = 0x8, scoped, tag = 'scoped memory for tpu_custom_call.1']
    #allocation9 [shape = 'u8[8192]{0}', space=vmem, size = 0x2000, scoped, tag = 'input window, operand 2, single buffered']
    #allocation10 [shape = 's32[1]{0}', space=sflag, size = 0x4, scoped, tag = 'scoped memory for tpu_custom_call.1']
    #allocation11 [shape = 'u8[32768]{0}', space=vmem, size = 0x8000, scoped, tag = 'output window, operand 0']
    %12 = vsyncpa [#allocation7], 0
    %s13 = scalar_lea.sflag [#allocation7], 1
    %14 = vsyncpa %s13, 0
    %15 = vsyncpa [#allocation10], 0
    %16 = vsyncpa [#allocation8], 0
    %s17 = scalar_lea.sflag [#allocation8], 1
    %18 = vsyncpa %s17, 0
    loop: start=0, step=1, limit=4
    $region2: #{tpu_custom_call.1} parent=1 // loop_pre_header
      _
    $region3: #{tpu_custom_call.1} parent=1 // loop_header
      %s20 = sphi 0, %s24
      %p21 = scmp.ge.s32.totalorder %s20, 4
      %s30 = sphi 0, %s32
      %s33 = sphi 0, %s30
      %s34 = sphi 0, %s33
      %s50 = sphi 0, %s34
      %s54 = sphi 0, %s54
      %s56 = sphi 0, %s54
      %s57 = sphi 0, %s56
      %s71 = sphi 0, %s57
      %s77 = sphi 0, %s79
      %s80 = sphi 0, %s77
      %s81 = sphi 0, %s80
      %s97 = sphi 0, %s81
    $region4: #{tpu_custom_call.1} parent=1 // loop_header_branch
      %23 = sbr.rel (%p21) target = $region8
    $region5: #{tpu_custom_call.1} parent=1 // loop_body
      %s25 = ssub.s32 %s20, 1
      %s26 = ssub.s32 %s20, 2
      %s27 = sadd.s32 %s20, 1
      %s28 = ssub.s32 %s20, %s27
      %p29 = scmp.eq.s32.totalorder %s28, 0
      %s31 = sadd.s32 %s30, 1
      %s32 = scalar_select %p29, %s30, %s31
      %p35 = pneg %p29
      %p36 = scmp.eq.s32.totalorder %s20, 1
      %p37 = por %p35, %p36
      %p38 = scmp.ne.s32.totalorder %s30, %s33
      %p39 = scmp.eq.s32.totalorder %s20, 0
      %p40 = por %p38, %p39
      %p41 = scmp.ne.s32.totalorder %s30, %s33
      %p42 = scmp.eq.s32.totalorder %s25, 1
      %p43 = por %p41, %p42
      %p44 = scmp.ne.s32.totalorder %s33, %s34
      %p45 = scmp.eq.s32.totalorder %s25, 0
      %p46 = por %p44, %p45
      %p47 = scmp.ne.s32.totalorder %s33, %s34
      %p48 = scmp.eq.s32.totalorder %s26, 1
      %p49 = por %p47, %p48
      %p51 = scmp.ne.s32.totalorder %s34, %s50
      %p52 = scmp.eq.s32.totalorder %s26, 0
      %p53 = por %p51, %p52
      %s55 = sadd.s32 %s54, 1
      %p58 = scmp.eq.s32.totalorder %s20, 1
      %p59 = scmp.ne.s32.totalorder %s54, %s56
      %p60 = scmp.eq.s32.totalorder %s20, 0
      %p61 = por %p59, %p60
      %p62 = scmp.ne.s32.totalorder %s54, %s56
      %p63 = scmp.eq.s32.totalorder %s25, 1
      %p64 = por %p62, %p63
      %p65 = scmp.ne.s32.totalorder %s56, %s57
      %p66 = scmp.eq.s32.totalorder %s25, 0
      %p67 = por %p65, %p66
      %p68 = scmp.ne.s32.totalorder %s56, %s57
      %p69 = scmp.eq.s32.totalorder %s26, 1
      %p70 = por %p68, %p69
      %p72 = scmp.ne.s32.totalorder %s57, %s71
      %p73 = scmp.eq.s32.totalorder %s26, 0
      %p74 = por %p72, %p73
      %s75 = ssub.s32 %s20, %s27
      %p76 = scmp.eq.s32.totalorder %s75, 0
      %s78 = sadd.s32 %s77, 1
      %s79 = scalar_select %p76, %s77, %s78
      %p82 = pneg %p76
      %p83 = scmp.eq.s32.totalorder %s20, 1
      %p84 = por %p82, %p83
      %p85 = scmp.ne.s32.totalorder %s77, %s80
      %p86 = scmp.eq.s32.totalorder %s20, 0
      %p87 = por %p85, %p86
      %p88 = scmp.ne.s32.totalorder %s77, %s80
      %p89 = scmp.eq.s32.totalorder %s25, 1
      %p90 = por %p88, %p89
      %p91 = scmp.ne.s32.totalorder %s80, %s81
      %p92 = scmp.eq.s32.totalorder %s25, 0
      %p93 = por %p91, %p92
      %p94 = scmp.ne.s32.totalorder %s80, %s81
      %p95 = scmp.eq.s32.totalorder %s26, 1
      %p96 = por %p94, %p95
      %p98 = scmp.ne.s32.totalorder %s81, %s97
      %p99 = scmp.eq.s32.totalorder %s26, 0
      %p100 = por %p98, %p99
      %p101 = scmp.le.s32.totalorder 1, %s20
      %p102 = scmp.lt.s32.totalorder %s20, 3
      %p103 = pnand %p101, %p102
      %p104 = pneg %p103
      // Predicated region
      $region9: #{tpu_custom_call.1} parent=5 // pred_check
        _
      $region10: #{tpu_custom_call.1} parent=5 // pred_check_branch
        %106 = sbr.rel (%p103) target = $region12
      $region11: #{tpu_custom_call.1} parent=5 // pred_region
        %s107 = ssub.s32 %s20, 1
        // Predicated region
        $region13: #{tpu_custom_call.1} parent=11 // pred_check
          %p108 = pneg %p67
        $region14: #{tpu_custom_call.1} parent=11 // pred_check_branch
          %110 = sbr.rel (%p108) target = $region16
        $region15: #{tpu_custom_call.1} parent=11 // pred_region
          %s112 = ssub.s32 256, 256
          %113 = vsyncadd [#allocation10], %s112
          %s114 = sshll.u32 [#allocation9], 4
          %s115 = int_to_ptr.vmem [resolvable:$true] %s114
          %120 = dma.hbm_to_vmem [thread:$0]  %s2, 256, %s115, [#allocation10], 64, 64, 4
        $region16: #{tpu_custom_call.1} parent=11 // pred_fallthru
          _
      $region12: #{tpu_custom_call.1} parent=5 // pred_fallthru
        _
      %p121 = scmp.lt.s32.totalorder %s20, 2
      // Predicated region
      $region17: #{tpu_custom_call.1} parent=5 // pred_check
        %p122 = pneg %p121
      $region18: #{tpu_custom_call.1} parent=5 // pred_check_branch
        %124 = sbr.rel (%p122) target = $region20
      $region19: #{tpu_custom_call.1} parent=5 // pred_region
        // Predicated region
        $region21: #{tpu_custom_call.1} parent=19 // pred_check
          %p125 = pneg %p40
        $region22: #{tpu_custom_call.1} parent=19 // pred_check_branch
          %127 = sbr.rel (%p125) target = $region24
        $region23: #{tpu_custom_call.1} parent=19 // pred_region
          %s128 = sand.u32 %s30, 1
          %s129 = scalar_lea.sflag [#allocation7], %s128
          %s130 = sand.u32 %s30, 1
          %s131 = smul.addr %s130, 32
          %s132 = scalar_lea.vmem [#allocation6], %s131
          %s133 = smul.u32 8, %s20
          %s135 = ssub.s32 512, 512
          %136 = vsyncadd %s129, %s135
          %s137 = smul.addr %s133, 64
          %s138 = scalar_lea.hbm %s1, %s137
          %s139 = sshll.u32 %s132, 4
          %s140 = int_to_ptr.vmem [resolvable:$true] %s139
          %145 = dma.hbm_to_vmem [thread:$0]  %s138, 512, %s140, %s129, 64, 64, 4
        $region24: #{tpu_custom_call.1} parent=19 // pred_fallthru
          _
      $region20: #{tpu_custom_call.1} parent=5 // pred_fallthru
        _
      %p146 = scmp.le.s32.totalorder 1, %s20
      %p147 = scmp.lt.s32.totalorder %s20, 3
      %p148 = pnand %p146, %p147
      %p149 = pneg %p148
      // Predicated region
      $region25: #{tpu_custom_call.1} parent=5 // pred_check
        _
      $region26: #{tpu_custom_call.1} parent=5 // pred_check_branch
        %151 = sbr.rel (%p148) target = $region28
      $region27: #{tpu_custom_call.1} parent=5 // pred_region
        %s152 = ssub.s32 %s20, 1
        %s153 = sand.u32 %s33, 1
        %s154 = scalar_lea.sflag [#allocation7], %s153
        %s155 = sand.u32 %s33, 1
        %s156 = smul.addr %s155, 32
        %s157 = scalar_lea.vmem [#allocation6], %s156
        // Predicated region
        $region29: #{tpu_custom_call.1} parent=27 // pred_check
          %p158 = pneg %p46
        $region30: #{tpu_custom_call.1} parent=27 // pred_check_branch
          %160 = sbr.rel (%p158) target = $region32
        $region31: #{tpu_custom_call.1} parent=27 // pred_region
          %161 = dma.done %s154, 512
        $region32: #{tpu_custom_call.1} parent=27 // pred_fallthru
          _
        // Predicated region
        $region33: #{tpu_custom_call.1} parent=27 // pred_check
          %p162 = pneg %p67
        $region34: #{tpu_custom_call.1} parent=27 // pred_check_branch
          %164 = sbr.rel (%p162) target = $region36
        $region35: #{tpu_custom_call.1} parent=27 // pred_region
          %165 = dma.done [#allocation10], 256
        $region36: #{tpu_custom_call.1} parent=27 // pred_fallthru
          _
        %s166 = sand.u32 %s33, 1
        %s167 = scalar_lea.sflag [#allocation7], %s166
        %s168 = sand.u32 %s33, 1
        %s169 = smul.addr %s168, 32
        %s170 = scalar_lea.vmem [#allocation6], %s169
        %p171 = pneg %p46
        %p172 = pneg %p43
        %p173 = pneg %p67
        %p174 = pneg %p64
        %p175 = pneg %p93
        %p176 = pneg %p90
        %s177 = sand.u32 %s80, 1
        %s178 = scalar_lea.sflag [#allocation8], %s177
        %s179 = sand.u32 %s80, 1
        %s180 = smul.addr %s179, 32
        %s181 = scalar_lea.vmem [#allocation11], %s180
        %s182 = smul.u32 8, %s25
        %s183 = smul.u32 8, %s25
        %p185 = scmp.eq.s32.totalorder %s25, 0
        // Predicated region
        $region37: #{tpu_custom_call.1} parent=27 // pred_check
          %p186 = pneg %p185
        $region38: #{tpu_custom_call.1} parent=27 // pred_check_branch
          %188 = sbr.rel (%p186) target = $region40
        $region39: #{tpu_custom_call.1} parent=27 // pred_region
          %vm189 = vcmask 257024
          %190 = vst.msk [vmem:[#allocation2] sm:$0xf] %vm189, 0.0
          %191 = vst.msk [vmem:[#allocation3] sm:$0xf] %vm189, 0.0
        $region40: #{tpu_custom_call.1} parent=27 // pred_fallthru
          _
        %v192 = vld [vmem:[#allocation9] sm:$0xf]
        %v193 = vld [vmem:[#allocation9 + $0x4] sm:$0xf]
        %v194 = vld [vmem:[#allocation9 + $0x8] sm:$0xf]
        %v195 = vld [vmem:[#allocation9 + $0xc] sm:$0xf]
        %v196 = vld [vmem:[%s157] sm:$0xf]
        %v197 = vld [vmem:[%s157 + $0x4] sm:$0xf]
        %v198 = vld [vmem:[%s157 + $0x8] sm:$0xf]
        %v199 = vld [vmem:[%s157 + $0xc] sm:$0xf]
        %v200 = vld [vmem:[%s157 + $0x10] sm:$0xf]
        %v201 = vld [vmem:[%s157 + $0x14] sm:$0xf]
        %v202 = vld [vmem:[%s157 + $0x18] sm:$0xf]
        %v203 = vld [vmem:[%s157 + $0x1c] sm:$0xf]
        %v204 = vlaneseq
        %v205 = vshrl.u32 %v204, 7
        %v206 = vld [vmem:[#allocation2] sm:$0xf]
        %v207 = vld [vmem:[#allocation3] sm:$0xf]
        %s208 = smul.u32 %s25, 8
        %v209 = vpack.c.bf16 %v206, %v206
        %v214 = vunpack.c.l.b16 %v192
        %v215 = vunpack.c.l.b16 %v193
        %v216 = vunpack.c.l.b16 %v194
        %v217 = vunpack.c.l.b16 %v195
        %v218 = vpack.c.b16 %v215, %v214
        %v219 = vpack.c.b16 %v217, %v216
        %vm222 = vcmask 261120
        %v224 = vsel %vm222, %v209, 0
        %226 = vmatprep.subr.bf16.mxu0 0
        %227 = vmatpush1.bf16.msra.mxu0 %v218
        %228 = vmatprep.subr.bf16.mxu0 0
        %229 = vmatpush1.bf16.msra.mxu0 %v219
        %230 = vmatprep.subr.bf16.mxu0 0
        %231 = vmatpush1.bf16.msra.mxu0 0
        %232 = vmatprep.subr.bf16.mxu0 0
        %233 = vmatpush1.bf16.msra.mxu0 0
        %234 = vmatprep.subr.bf16.mxu0 0
        %235 = vmatpush1.bf16.msra.mxu0 0
        %236 = vmatprep.subr.bf16.mxu0 0
        %237 = vmatpush1.bf16.msra.mxu0 0
        %238 = vmatprep.subr.bf16.mxu0 0
        %239 = vmatpush1.bf16.msra.mxu0 0
        %240 = vmatprep.subr.bf16.mxu0 0
        %241 = vmatpush1.bf16.msra.mxu0 0
        %242 = vmatprep.subr.bf16.mxu0 0
        %243 = vmatpush1.bf16.msra.mxu0 0
        %244 = vmatprep.subr.bf16.mxu0 0
        %245 = vmatpush1.bf16.msra.mxu0 0
        %246 = vmatprep.subr.bf16.mxu0 0
        %247 = vmatpush1.bf16.msra.mxu0 0
        %248 = vmatprep.subr.bf16.mxu0 0
        %249 = vmatpush1.bf16.msra.mxu0 0
        %250 = vmatprep.subr.bf16.mxu0 0
        %251 = vmatpush1.bf16.msra.mxu0 0
        %252 = vmatprep.subr.bf16.mxu0 0
        %253 = vmatpush1.bf16.msra.mxu0 0
        %254 = vmatprep.subr.bf16.mxu0 0
        %255 = vmatpush1.bf16.msra.mxu0 0
        %256 = vmatprep.subr.bf16.mxu0 0
        %257 = vmatpush1.bf16.msra.mxu0 0
        %258 = vmatprep.mubr.bf16.mxu0 0
        %259 = vmatmul.mubr.bf16.gmra.mrb[0].mxu0 %v224
        %v260 = vpop.f32.mrb[0].mxu0
        %v261 = vadd.f32 0.0, %v260
        %v262 = vpop.f32.mrb[0].mxu0
        %v263 = vpop.f32.mrb[0].mxu0
        %v264 = vpop.f32.mrb[0].mxu0
        %265 = vdwg.mxu0
        %v266 = vadd.f32 %v196, %v261
        %v267 = vxor.u32 %v266, 2147483648
        %v268 = vmul.f32 %v267, 1.442695
        %v269 = vpow.pop %v268
        %v270 = vadd.f32 %v269, 1.0
        %v271 = vrcp.pop %v270
        %v272 = vmul.f32 1.0, %v271
        %v273 = vtanh.pop %v266
        %275 = vrot.lane.b32.xlu0 %v207, 32
        %v276 = vpop.permute.xlu0 %275
        %v278 = vmul.f32 %v272, %v276
        %280 = vrot.lane.b32.xlu0 %v273, 32
        %v281 = vpop.permute.xlu0 %280
        %v283 = vmul.f32 %v272, %v281
        %285 = vrot.lane.b32.xlu0 %v283, 32
        %v286 = vpop.permute.xlu0 %285
        %v288 = vadd.f32 %v278, %v286
        %v289 = vtanh.pop %v288
        %291 = vrot.lane.b32.xlu0 %v289, 32
        %v292 = vpop.permute.xlu0 %291
        %v294 = vmul.f32 %v272, %v292
        %s295 = sld [smem:[#allocation5 + %s208]]
        %v296 = vstv %s295
        %vm297 = vcmp.lt.s32.totalorder %v205, %v296
        %v298 = vsel %vm297, 1, 0
        %vm299 = vcmp.eq.s32.totalorder %v298, 1
        %v300 = vsel %vm299, %v288, %v276
        %302 = vrot.lane.b32.xlu0 %v206, 64
        %v303 = vpop.permute.xlu0 %302
        %v305 = vsel %vm299, %v294, %v303
        %v306 = vsel %vm299, %v294, 0.0
        %308 = vrot.lane.b32.xlu0 %v306, 64
        %v309 = vpop.permute.xlu0 %308
        %vm311 = vcmask 257024
        %312 = vst.msk [vmem:[%s181] sm:$0xf] %vm311, %v309
        %s313 = sadd.s32 %s208, 1
        %v314 = vpack.c.bf16 %v305, %v305
        %316 = vrot.lane.b32.xlu0 %v314, 64
        %v317 = vpop.permute.xlu0 %316
        %v319 = vsel %vm222, %v317, 0
        %321 = vmatprep.subr.bf16.mxu0 0
        %322 = vmatpush1.bf16.msra.mxu0 %v218
        %323 = vmatprep.subr.bf16.mxu0 0
        %324 = vmatpush1.bf16.msra.mxu0 %v219
        %325 = vmatprep.subr.bf16.mxu0 0
        %326 = vmatpush1.bf16.msra.mxu0 0
        %327 = vmatprep.subr.bf16.mxu0 0
        %328 = vmatpush1.bf16.msra.mxu0 0
        %329 = vmatprep.subr.bf16.mxu0 0
        %330 = vmatpush1.bf16.msra.mxu0 0
        %331 = vmatprep.subr.bf16.mxu0 0
        %332 = vmatpush1.bf16.msra.mxu0 0
        %333 = vmatprep.subr.bf16.mxu0 0
        %334 = vmatpush1.bf16.msra.mxu0 0
        %335 = vmatprep.subr.bf16.mxu0 0
        %336 = vmatpush1.bf16.msra.mxu0 0
        %337 = vmatprep.subr.bf16.mxu0 0
        %338 = vmatpush1.bf16.msra.mxu0 0
        %339 = vmatprep.subr.bf16.mxu0 0
        %340 = vmatpush1.bf16.msra.mxu0 0
        %341 = vmatprep.subr.bf16.mxu0 0
        %342 = vmatpush1.bf16.msra.mxu0 0
        %343 = vmatprep.subr.bf16.mxu0 0
        %344 = vmatpush1.bf16.msra.mxu0 0
        %345 = vmatprep.subr.bf16.mxu0 0
        %346 = vmatpush1.bf16.msra.mxu0 0
        %347 = vmatprep.subr.bf16.mxu0 0
        %348 = vmatpush1.bf16.msra.mxu0 0
        %349 = vmatprep.subr.bf16.mxu0 0
        %350 = vmatpush1.bf16.msra.mxu0 0
        %351 = vmatprep.subr.bf16.mxu0 0
        %352 = vmatpush1.bf16.msra.mxu0 0
        %353 = vmatprep.mubr.bf16.mxu0 0
        %354 = vmatmul.mubr.bf16.gmra.mrb[0].mxu0 %v319
        %v355 = vpop.f32.mrb[0].mxu0
        %v356 = vadd.f32 0.0, %v355
        %v357 = vpop.f32.mrb[0].mxu0
        %v358 = vpop.f32.mrb[0].mxu0
        %v359 = vpop.f32.mrb[0].mxu0
        %360 = vdwg.mxu0
        %v361 = vadd.f32 %v197, %v356
        %v362 = vxor.u32 %v361, 2147483648
        %v363 = vmul.f32 %v362, 1.442695
        %v364 = vpow.pop %v363
        %v365 = vadd.f32 %v364, 1.0
        %v366 = vrcp.pop %v365
        %v367 = vmul.f32 1.0, %v366
        %v368 = vtanh.pop %v361
        %v369 = vmul.f32 %v367, %v300
        %371 = vrot.lane.b32.xlu0 %v368, 32
        %v372 = vpop.permute.xlu0 %371
        %v374 = vmul.f32 %v367, %v372
        %376 = vrot.lane.b32.xlu0 %v374, 32
        %v377 = vpop.permute.xlu0 %376
        %v379 = vadd.f32 %v369, %v377
        %v380 = vtanh.pop %v379
        %382 = vrot.lane.b32.xlu0 %v380, 32
        %v383 = vpop.permute.xlu0 %382
        %v385 = vmul.f32 %v367, %v383
        %s386 = sld [smem:[#allocation5 + %s313]]
        %v387 = vstv %s386
        %vm388 = vcmp.lt.s32.totalorder %v205, %v387
        %v389 = vsel %vm388, 1, 0
        %vm390 = vcmp.eq.s32.totalorder %v389, 1
        %v391 = vsel %vm390, %v379, %v300
        %v392 = vsel %vm390, %v385, %v305
        %v393 = vsel %vm390, %v385, 0.0
        %395 = vrot.lane.b32.xlu0 %v393, 64
        %v396 = vpop.permute.xlu0 %395
        %s398 = scalar_lea.vmem %s181, 4 [#allocation11]
        %399 = vst.msk [vmem:[%s398] sm:$0xf] %vm311, %v396
        %s400 = sadd.s32 %s208, 2
        %v401 = vpack.c.bf16 %v392, %v392
        %403 = vrot.lane.b32.xlu0 %v401, 64
        %v404 = vpop.permute.xlu0 %403
        %v406 = vsel %vm222, %v404, 0
        %408 = vmatprep.subr.bf16.mxu0 0
        %409 = vmatpush1.bf16.msra.mxu0 %v218
        %410 = vmatprep.subr.bf16.mxu0 0
        %411 = vmatpush1.bf16.msra.mxu0 %v219
        %412 = vmatprep.subr.bf16.mxu0 0
        %413 = vmatpush1.bf16.msra.mxu0 0
        %414 = vmatprep.subr.bf16.mxu0 0
        %415 = vmatpush1.bf16.msra.mxu0 0
        %416 = vmatprep.subr.bf16.mxu0 0
        %417 = vmatpush1.bf16.msra.mxu0 0
        %418 = vmatprep.subr.bf16.mxu0 0
        %419 = vmatpush1.bf16.msra.mxu0 0
        %420 = vmatprep.subr.bf16.mxu0 0
        %421 = vmatpush1.bf16.msra.mxu0 0
        %422 = vmatprep.subr.bf16.mxu0 0
        %423 = vmatpush1.bf16.msra.mxu0 0
        %424 = vmatprep.subr.bf16.mxu0 0
        %425 = vmatpush1.bf16.msra.mxu0 0
        %426 = vmatprep.subr.bf16.mxu0 0
        %427 = vmatpush1.bf16.msra.mxu0 0
        %428 = vmatprep.subr.bf16.mxu0 0
        %429 = vmatpush1.bf16.msra.mxu0 0
        %430 = vmatprep.subr.bf16.mxu0 0
        %431 = vmatpush1.bf16.msra.mxu0 0
        %432 = vmatprep.subr.bf16.mxu0 0
        %433 = vmatpush1.bf16.msra.mxu0 0
        %434 = vmatprep.subr.bf16.mxu0 0
        %435 = vmatpush1.bf16.msra.mxu0 0
        %436 = vmatprep.subr.bf16.mxu0 0
        %437 = vmatpush1.bf16.msra.mxu0 0
        %438 = vmatprep.subr.bf16.mxu0 0
        %439 = vmatpush1.bf16.msra.mxu0 0
        %440 = vmatprep.mubr.bf16.mxu0 0
        %441 = vmatmul.mubr.bf16.gmra.mrb[0].mxu0 %v406
        %v442 = vpop.f32.mrb[0].mxu0
        %v443 = vadd.f32 0.0, %v442
        %v444 = vpop.f32.mrb[0].mxu0
        %v445 = vpop.f32.mrb[0].mxu0
        %v446 = vpop.f32.mrb[0].mxu0
        %447 = vdwg.mxu0
        %v448 = vadd.f32 %v198, %v443
        %v449 = vxor.u32 %v448, 2147483648
        %v450 = vmul.f32 %v449, 1.442695
        %v451 = vpow.pop %v450
        %v452 = vadd.f32 %v451, 1.0
        %v453 = vrcp.pop %v452
        %v454 = vmul.f32 1.0, %v453
        %v455 = vtanh.pop %v448
        %v456 = vmul.f32 %v454, %v391
        %458 = vrot.lane.b32.xlu0 %v455, 32
        %v459 = vpop.permute.xlu0 %458
        %v461 = vmul.f32 %v454, %v459
        %463 = vrot.lane.b32.xlu0 %v461, 32
        %v464 = vpop.permute.xlu0 %463
        %v466 = vadd.f32 %v456, %v464
        %v467 = vtanh.pop %v466
        %469 = vrot.lane.b32.xlu0 %v467, 32
        %v470 = vpop.permute.xlu0 %469
        %v472 = vmul.f32 %v454, %v470
        %s473 = sld [smem:[#allocation5 + %s400]]
        %v474 = vstv %s473
        %vm475 = vcmp.lt.s32.totalorder %v205, %v474
        %v476 = vsel %vm475, 1, 0
        %vm477 = vcmp.eq.s32.totalorder %v476, 1
        %v478 = vsel %vm477, %v466, %v391
        %v479 = vsel %vm477, %v472, %v392
        %v480 = vsel %vm477, %v472, 0.0
        %482 = vrot.lane.b32.xlu0 %v480, 64
        %v483 = vpop.permute.xlu0 %482
        %s485 = scalar_lea.vmem %s181, 8 [#allocation11]
        %486 = vst.msk [vmem:[%s485] sm:$0xf] %vm311, %v483
        %s487 = sadd.s32 %s208, 3
        %v488 = vpack.c.bf16 %v479, %v479
        %490 = vrot.lane.b32.xlu0 %v488, 64
        %v491 = vpop.permute.xlu0 %490
        %v493 = vsel %vm222, %v491, 0
        %495 = vmatprep.subr.bf16.mxu0 0
        %496 = vmatpush1.bf16.msra.mxu0 %v218
        %497 = vmatprep.subr.bf16.mxu0 0
        %498 = vmatpush1.bf16.msra.mxu0 %v219
        %499 = vmatprep.subr.bf16.mxu0 0
        %500 = vmatpush1.bf16.msra.mxu0 0
        %501 = vmatprep.subr.bf16.mxu0 0
        %502 = vmatpush1.bf16.msra.mxu0 0
        %503 = vmatprep.subr.bf16.mxu0 0
        %504 = vmatpush1.bf16.msra.mxu0 0
        %505 = vmatprep.subr.bf16.mxu0 0
        %506 = vmatpush1.bf16.msra.mxu0 0
        %507 = vmatprep.subr.bf16.mxu0 0
        %508 = vmatpush1.bf16.msra.mxu0 0
        %509 = vmatprep.subr.bf16.mxu0 0
        %510 = vmatpush1.bf16.msra.mxu0 0
        %511 = vmatprep.subr.bf16.mxu0 0
        %512 = vmatpush1.bf16.msra.mxu0 0
        %513 = vmatprep.subr.bf16.mxu0 0
        %514 = vmatpush1.bf16.msra.mxu0 0
        %515 = vmatprep.subr.bf16.mxu0 0
        %516 = vmatpush1.bf16.msra.mxu0 0
        %517 = vmatprep.subr.bf16.mxu0 0
        %518 = vmatpush1.bf16.msra.mxu0 0
        %519 = vmatprep.subr.bf16.mxu0 0
        %520 = vmatpush1.bf16.msra.mxu0 0
        %521 = vmatprep.subr.bf16.mxu0 0
        %522 = vmatpush1.bf16.msra.mxu0 0
        %523 = vmatprep.subr.bf16.mxu0 0
        %524 = vmatpush1.bf16.msra.mxu0 0
        %525 = vmatprep.subr.bf16.mxu0 0
        %526 = vmatpush1.bf16.msra.mxu0 0
        %527 = vmatprep.mubr.bf16.mxu0 0
        %528 = vmatmul.mubr.bf16.gmra.mrb[0].mxu0 %v493
        %v529 = vpop.f32.mrb[0].mxu0
        %v530 = vadd.f32 0.0, %v529
        %v531 = vpop.f32.mrb[0].mxu0
        %v532 = vpop.f32.mrb[0].mxu0
        %v533 = vpop.f32.mrb[0].mxu0
        %534 = vdwg.mxu0
        %v535 = vadd.f32 %v199, %v530
        %v536 = vxor.u32 %v535, 2147483648
        %v537 = vmul.f32 %v536, 1.442695
        %v538 = vpow.pop %v537
        %v539 = vadd.f32 %v538, 1.0
        %v540 = vrcp.pop %v539
        %v541 = vmul.f32 1.0, %v540
        %v542 = vtanh.pop %v535
        %v543 = vmul.f32 %v541, %v478
        %545 = vrot.lane.b32.xlu0 %v542, 32
        %v546 = vpop.permute.xlu0 %545
        %v548 = vmul.f32 %v541, %v546
        %550 = vrot.lane.b32.xlu0 %v548, 32
        %v551 = vpop.permute.xlu0 %550
        %v553 = vadd.f32 %v543, %v551
        %v554 = vtanh.pop %v553
        %556 = vrot.lane.b32.xlu0 %v554, 32
        %v557 = vpop.permute.xlu0 %556
        %v559 = vmul.f32 %v541, %v557
        %s560 = sld [smem:[#allocation5 + %s487]]
        %v561 = vstv %s560
        %vm562 = vcmp.lt.s32.totalorder %v205, %v561
        %v563 = vsel %vm562, 1, 0
        %vm564 = vcmp.eq.s32.totalorder %v563, 1
        %v565 = vsel %vm564, %v553, %v478
        %v566 = vsel %vm564, %v559, %v479
        %v567 = vsel %vm564, %v559, 0.0
        %569 = vrot.lane.b32.xlu0 %v567, 64
        %v570 = vpop.permute.xlu0 %569
        %s572 = scalar_lea.vmem %s181, 12 [#allocation11]
        %573 = vst.msk [vmem:[%s572] sm:$0xf] %vm311, %v570
        %s574 = sadd.s32 %s208, 4
        %v575 = vpack.c.bf16 %v566, %v566
        %577 = vrot.lane.b32.xlu0 %v575, 64
        %v578 = vpop.permute.xlu0 %577
        %v580 = vsel %vm222, %v578, 0
        %582 = vmatprep.subr.bf16.mxu0 0
        %583 = vmatpush1.bf16.msra.mxu0 %v218
        %584 = vmatprep.subr.bf16.mxu0 0
        %585 = vmatpush1.bf16.msra.mxu0 %v219
        %586 = vmatprep.subr.bf16.mxu0 0
        %587 = vmatpush1.bf16.msra.mxu0 0
        %588 = vmatprep.subr.bf16.mxu0 0
        %589 = vmatpush1.bf16.msra.mxu0 0
        %590 = vmatprep.subr.bf16.mxu0 0
        %591 = vmatpush1.bf16.msra.mxu0 0
        %592 = vmatprep.subr.bf16.mxu0 0
        %593 = vmatpush1.bf16.msra.mxu0 0
        %594 = vmatprep.subr.bf16.mxu0 0
        %595 = vmatpush1.bf16.msra.mxu0 0
        %596 = vmatprep.subr.bf16.mxu0 0
        %597 = vmatpush1.bf16.msra.mxu0 0
        %598 = vmatprep.subr.bf16.mxu0 0
        %599 = vmatpush1.bf16.msra.mxu0 0
        %600 = vmatprep.subr.bf16.mxu0 0
        %601 = vmatpush1.bf16.msra.mxu0 0
        %602 = vmatprep.subr.bf16.mxu0 0
        %603 = vmatpush1.bf16.msra.mxu0 0
        %604 = vmatprep.subr.bf16.mxu0 0
        %605 = vmatpush1.bf16.msra.mxu0 0
        %606 = vmatprep.subr.bf16.mxu0 0
        %607 = vmatpush1.bf16.msra.mxu0 0
        %608 = vmatprep.subr.bf16.mxu0 0
        %609 = vmatpush1.bf16.msra.mxu0 0
        %610 = vmatprep.subr.bf16.mxu0 0
        %611 = vmatpush1.bf16.msra.mxu0 0
        %612 = vmatprep.subr.bf16.mxu0 0
        %613 = vmatpush1.bf16.msra.mxu0 0
        %614 = vmatprep.mubr.bf16.mxu0 0
        %615 = vmatmul.mubr.bf16.gmra.mrb[0].mxu0 %v580
        %v616 = vpop.f32.mrb[0].mxu0
        %v617 = vadd.f32 0.0, %v616
        %v618 = vpop.f32.mrb[0].mxu0
        %v619 = vpop.f32.mrb[0].mxu0
        %v620 = vpop.f32.mrb[0].mxu0
        %621 = vdwg.mxu0
        %v622 = vadd.f32 %v200, %v617
        %v623 = vxor.u32 %v622, 2147483648
        %v624 = vmul.f32 %v623, 1.442695
        %v625 = vpow.pop %v624
        %v626 = vadd.f32 %v625, 1.0
        %v627 = vrcp.pop %v626
        %v628 = vmul.f32 1.0, %v627
        %v629 = vtanh.pop %v622
        %v630 = vmul.f32 %v628, %v565
        %632 = vrot.lane.b32.xlu0 %v629, 32
        %v633 = vpop.permute.xlu0 %632
        %v635 = vmul.f32 %v628, %v633
        %637 = vrot.lane.b32.xlu0 %v635, 32
        %v638 = vpop.permute.xlu0 %637
        %v640 = vadd.f32 %v630, %v638
        %v641 = vtanh.pop %v640
        %643 = vrot.lane.b32.xlu0 %v641, 32
        %v644 = vpop.permute.xlu0 %643
        %v646 = vmul.f32 %v628, %v644
        %s647 = sld [smem:[#allocation5 + %s574]]
        %v648 = vstv %s647
        %vm649 = vcmp.lt.s32.totalorder %v205, %v648
        %v650 = vsel %vm649, 1, 0
        %vm651 = vcmp.eq.s32.totalorder %v650, 1
        %v652 = vsel %vm651, %v640, %v565
        %v653 = vsel %vm651, %v646, %v566
        %v654 = vsel %vm651, %v646, 0.0
        %656 = vrot.lane.b32.xlu0 %v654, 64
        %v657 = vpop.permute.xlu0 %656
        %s659 = scalar_lea.vmem %s181, 16 [#allocation11]
        %660 = vst.msk [vmem:[%s659] sm:$0xf] %vm311, %v657
        %s661 = sadd.s32 %s208, 5
        %v662 = vpack.c.bf16 %v653, %v653
        %664 = vrot.lane.b32.xlu0 %v662, 64
        %v665 = vpop.permute.xlu0 %664
        %v667 = vsel %vm222, %v665, 0
        %669 = vmatprep.subr.bf16.mxu0 0
        %670 = vmatpush1.bf16.msra.mxu0 %v218
        %671 = vmatprep.subr.bf16.mxu0 0
        %672 = vmatpush1.bf16.msra.mxu0 %v219
        %673 = vmatprep.subr.bf16.mxu0 0
        %674 = vmatpush1.bf16.msra.mxu0 0
        %675 = vmatprep.subr.bf16.mxu0 0
        %676 = vmatpush1.bf16.msra.mxu0 0
        %677 = vmatprep.subr.bf16.mxu0 0
        %678 = vmatpush1.bf16.msra.mxu0 0
        %679 = vmatprep.subr.bf16.mxu0 0
        %680 = vmatpush1.bf16.msra.mxu0 0
        %681 = vmatprep.subr.bf16.mxu0 0
        %682 = vmatpush1.bf16.msra.mxu0 0
        %683 = vmatprep.subr.bf16.mxu0 0
        %684 = vmatpush1.bf16.msra.mxu0 0
        %685 = vmatprep.subr.bf16.mxu0 0
        %686 = vmatpush1.bf16.msra.mxu0 0
        %687 = vmatprep.subr.bf16.mxu0 0
        %688 = vmatpush1.bf16.msra.mxu0 0
        %689 = vmatprep.subr.bf16.mxu0 0
        %690 = vmatpush1.bf16.msra.mxu0 0
        %691 = vmatprep.subr.bf16.mxu0 0
        %692 = vmatpush1.bf16.msra.mxu0 0
        %693 = vmatprep.subr.bf16.mxu0 0
        %694 = vmatpush1.bf16.msra.mxu0 0
        %695 = vmatprep.subr.bf16.mxu0 0
        %696 = vmatpush1.bf16.msra.mxu0 0
        %697 = vmatprep.subr.bf16.mxu0 0
        %698 = vmatpush1.bf16.msra.mxu0 0
        %699 = vmatprep.subr.bf16.mxu0 0
        %700 = vmatpush1.bf16.msra.mxu0 0
        %701 = vmatprep.mubr.bf16.mxu0 0
        %702 = vmatmul.mubr.bf16.gmra.mrb[0].mxu0 %v667
        %v703 = vpop.f32.mrb[0].mxu0
        %v704 = vadd.f32 0.0, %v703
        %v705 = vpop.f32.mrb[0].mxu0
        %v706 = vpop.f32.mrb[0].mxu0
        %v707 = vpop.f32.mrb[0].mxu0
        %708 = vdwg.mxu0
        %v709 = vadd.f32 %v201, %v704
        %v710 = vxor.u32 %v709, 2147483648
        %v711 = vmul.f32 %v710, 1.442695
        %v712 = vpow.pop %v711
        %v713 = vadd.f32 %v712, 1.0
        %v714 = vrcp.pop %v713
        %v715 = vmul.f32 1.0, %v714
        %v716 = vtanh.pop %v709
        %v717 = vmul.f32 %v715, %v652
        %719 = vrot.lane.b32.xlu0 %v716, 32
        %v720 = vpop.permute.xlu0 %719
        %v722 = vmul.f32 %v715, %v720
        %724 = vrot.lane.b32.xlu0 %v722, 32
        %v725 = vpop.permute.xlu0 %724
        %v727 = vadd.f32 %v717, %v725
        %v728 = vtanh.pop %v727
        %730 = vrot.lane.b32.xlu0 %v728, 32
        %v731 = vpop.permute.xlu0 %730
        %v733 = vmul.f32 %v715, %v731
        %s734 = sld [smem:[#allocation5 + %s661]]
        %v735 = vstv %s734
        %vm736 = vcmp.lt.s32.totalorder %v205, %v735
        %v737 = vsel %vm736, 1, 0
        %vm738 = vcmp.eq.s32.totalorder %v737, 1
        %v739 = vsel %vm738, %v727, %v652
        %v740 = vsel %vm738, %v733, %v653
        %v741 = vsel %vm738, %v733, 0.0
        %743 = vrot.lane.b32.xlu0 %v741, 64
        %v744 = vpop.permute.xlu0 %743
        %s746 = scalar_lea.vmem %s181, 20 [#allocation11]
        %747 = vst.msk [vmem:[%s746] sm:$0xf] %vm311, %v744
        %s748 = sadd.s32 %s208, 6
        %v749 = vpack.c.bf16 %v740, %v740
        %751 = vrot.lane.b32.xlu0 %v749, 64
        %v752 = vpop.permute.xlu0 %751
        %v754 = vsel %vm222, %v752, 0
        %756 = vmatprep.subr.bf16.mxu0 0
        %757 = vmatpush1.bf16.msra.mxu0 %v218
        %758 = vmatprep.subr.bf16.mxu0 0
        %759 = vmatpush1.bf16.msra.mxu0 %v219
        %760 = vmatprep.subr.bf16.mxu0 0
        %761 = vmatpush1.bf16.msra.mxu0 0
        %762 = vmatprep.subr.bf16.mxu0 0
        %763 = vmatpush1.bf16.msra.mxu0 0
        %764 = vmatprep.subr.bf16.mxu0 0
        %765 = vmatpush1.bf16.msra.mxu0 0
        %766 = vmatprep.subr.bf16.mxu0 0
        %767 = vmatpush1.bf16.msra.mxu0 0
        %768 = vmatprep.subr.bf16.mxu0 0
        %769 = vmatpush1.bf16.msra.mxu0 0
        %770 = vmatprep.subr.bf16.mxu0 0
        %771 = vmatpush1.bf16.msra.mxu0 0
        %772 = vmatprep.subr.bf16.mxu0 0
        %773 = vmatpush1.bf16.msra.mxu0 0
        %774 = vmatprep.subr.bf16.mxu0 0
        %775 = vmatpush1.bf16.msra.mxu0 0
        %776 = vmatprep.subr.bf16.mxu0 0
        %777 = vmatpush1.bf16.msra.mxu0 0
        %778 = vmatprep.subr.bf16.mxu0 0
        %779 = vmatpush1.bf16.msra.mxu0 0
        %780 = vmatprep.subr.bf16.mxu0 0
        %781 = vmatpush1.bf16.msra.mxu0 0
        %782 = vmatprep.subr.bf16.mxu0 0
        %783 = vmatpush1.bf16.msra.mxu0 0
        %784 = vmatprep.subr.bf16.mxu0 0
        %785 = vmatpush1.bf16.msra.mxu0 0
        %786 = vmatprep.subr.bf16.mxu0 0
        %787 = vmatpush1.bf16.msra.mxu0 0
        %788 = vmatprep.mubr.bf16.mxu0 0
        %789 = vmatmul.mubr.bf16.gmra.mrb[0].mxu0 %v754
        %v790 = vpop.f32.mrb[0].mxu0
        %v791 = vadd.f32 0.0, %v790
        %v792 = vpop.f32.mrb[0].mxu0
        %v793 = vpop.f32.mrb[0].mxu0
        %v794 = vpop.f32.mrb[0].mxu0
        %795 = vdwg.mxu0
        %v796 = vadd.f32 %v202, %v791
        %v797 = vxor.u32 %v796, 2147483648
        %v798 = vmul.f32 %v797, 1.442695
        %v799 = vpow.pop %v798
        %v800 = vadd.f32 %v799, 1.0
        %v801 = vrcp.pop %v800
        %v802 = vmul.f32 1.0, %v801
        %v803 = vtanh.pop %v796
        %v804 = vmul.f32 %v802, %v739
        %806 = vrot.lane.b32.xlu0 %v803, 32
        %v807 = vpop.permute.xlu0 %806
        %v809 = vmul.f32 %v802, %v807
        %811 = vrot.lane.b32.xlu0 %v809, 32
        %v812 = vpop.permute.xlu0 %811
        %v814 = vadd.f32 %v804, %v812
        %v815 = vtanh.pop %v814
        %817 = vrot.lane.b32.xlu0 %v815, 32
        %v818 = vpop.permute.xlu0 %817
        %v820 = vmul.f32 %v802, %v818
        %s821 = sld [smem:[#allocation5 + %s748]]
        %v822 = vstv %s821
        %vm823 = vcmp.lt.s32.totalorder %v205, %v822
        %v824 = vsel %vm823, 1, 0
        %vm825 = vcmp.eq.s32.totalorder %v824, 1
        %v826 = vsel %vm825, %v814, %v739
        %v827 = vsel %vm825, %v820, %v740
        %v828 = vsel %vm825, %v820, 0.0
        %830 = vrot.lane.b32.xlu0 %v828, 64
        %v831 = vpop.permute.xlu0 %830
        %s833 = scalar_lea.vmem %s181, 24 [#allocation11]
        %834 = vst.msk [vmem:[%s833] sm:$0xf] %vm311, %v831
        %s835 = sadd.s32 %s208, 7
        %v836 = vpack.c.bf16 %v827, %v827
        %838 = vrot.lane.b32.xlu0 %v836, 64
        %v839 = vpop.permute.xlu0 %838
        %v841 = vsel %vm222, %v839, 0
        %843 = vmatprep.subr.bf16.mxu0 0
        %844 = vmatpush1.bf16.msra.mxu0 %v218
        %845 = vmatprep.subr.bf16.mxu0 0
        %846 = vmatpush1.bf16.msra.mxu0 %v219
        %847 = vmatprep.subr.bf16.mxu0 0
        %848 = vmatpush1.bf16.msra.mxu0 0
        %849 = vmatprep.subr.bf16.mxu0 0
        %850 = vmatpush1.bf16.msra.mxu0 0
        %851 = vmatprep.subr.bf16.mxu0 0
        %852 = vmatpush1.bf16.msra.mxu0 0
        %853 = vmatprep.subr.bf16.mxu0 0
        %854 = vmatpush1.bf16.msra.mxu0 0
        %855 = vmatprep.subr.bf16.mxu0 0
        %856 = vmatpush1.bf16.msra.mxu0 0
        %857 = vmatprep.subr.bf16.mxu0 0
        %858 = vmatpush1.bf16.msra.mxu0 0
        %859 = vmatprep.subr.bf16.mxu0 0
        %860 = vmatpush1.bf16.msra.mxu0 0
        %861 = vmatprep.subr.bf16.mxu0 0
        %862 = vmatpush1.bf16.msra.mxu0 0
        %863 = vmatprep.subr.bf16.mxu0 0
        %864 = vmatpush1.bf16.msra.mxu0 0
        %865 = vmatprep.subr.bf16.mxu0 0
        %866 = vmatpush1.bf16.msra.mxu0 0
        %867 = vmatprep.subr.bf16.mxu0 0
        %868 = vmatpush1.bf16.msra.mxu0 0
        %869 = vmatprep.subr.bf16.mxu0 0
        %870 = vmatpush1.bf16.msra.mxu0 0
        %871 = vmatprep.subr.bf16.mxu0 0
        %872 = vmatpush1.bf16.msra.mxu0 0
        %873 = vmatprep.subr.bf16.mxu0 0
        %874 = vmatpush1.bf16.msra.mxu0 0
        %875 = vmatprep.mubr.bf16.mxu0 0
        %876 = vmatmul.mubr.bf16.gmra.mrb[0].mxu0 %v841
        %v877 = vpop.f32.mrb[0].mxu0
        %v878 = vadd.f32 0.0, %v877
        %v879 = vpop.f32.mrb[0].mxu0
        %v880 = vpop.f32.mrb[0].mxu0
        %v881 = vpop.f32.mrb[0].mxu0
        %882 = vdwg.mxu0
        %v883 = vadd.f32 %v203, %v878
        %v884 = vxor.u32 %v883, 2147483648
        %v885 = vmul.f32 %v884, 1.442695
        %v886 = vpow.pop %v885
        %v887 = vadd.f32 %v886, 1.0
        %v888 = vrcp.pop %v887
        %v889 = vmul.f32 1.0, %v888
        %v890 = vtanh.pop %v883
        %v891 = vmul.f32 %v889, %v826
        %893 = vrot.lane.b32.xlu0 %v890, 32
        %v894 = vpop.permute.xlu0 %893
        %v896 = vmul.f32 %v889, %v894
        %898 = vrot.lane.b32.xlu0 %v896, 32
        %v899 = vpop.permute.xlu0 %898
        %v901 = vadd.f32 %v891, %v899
        %v902 = vtanh.pop %v901
        %904 = vrot.lane.b32.xlu0 %v902, 32
        %v905 = vpop.permute.xlu0 %904
        %v907 = vmul.f32 %v889, %v905
        %s908 = sld [smem:[#allocation5 + %s835]]
        %v909 = vstv %s908
        %vm910 = vcmp.lt.s32.totalorder %v205, %v909
        %v911 = vsel %vm910, 1, 0
        %vm912 = vcmp.eq.s32.totalorder %v911, 1
        %v913 = vsel %vm912, %v901, %v826
        %v914 = vsel %vm912, %v907, %v827
        %v915 = vsel %vm912, %v907, 0.0
        %917 = vrot.lane.b32.xlu0 %v915, 64
        %v918 = vpop.permute.xlu0 %917
        %s920 = scalar_lea.vmem %s181, 28 [#allocation11]
        %921 = vst.msk [vmem:[%s920] sm:$0xf] %vm311, %v918
        %923 = vrot.lane.b32.xlu0 %v914, 64
        %v924 = vpop.permute.xlu0 %923
        %926 = vst.msk [vmem:[#allocation2] sm:$0xf] %vm311, %v924
        %928 = vrot.lane.b32.xlu0 %v913, 96
        %v929 = vpop.permute.xlu0 %928
        %931 = vst.msk [vmem:[#allocation3] sm:$0xf] %vm311, %v929
        %s932 = sand.u32 %s80, 1
        %s933 = scalar_lea.sflag [#allocation8], %s932
        %s934 = sand.u32 %s80, 1
        %s935 = smul.addr %s934, 32
        %s936 = scalar_lea.vmem [#allocation11], %s935
        // Predicated region
        $region41: #{tpu_custom_call.1} parent=27 // pred_check
          %p937 = pneg %p90
        $region42: #{tpu_custom_call.1} parent=27 // pred_check_branch
          %939 = sbr.rel (%p937) target = $region44
        $region43: #{tpu_custom_call.1} parent=27 // pred_region
          %s940 = smul.u32 8, %s25
          %s942 = ssub.s32 512, 512
          %943 = vsyncadd %s933, %s942
          %s944 = smul.addr %s940, 64
          %s945 = scalar_lea.hbm %s3, %s944
          %s946 = sshll.u32 %s936, 4
          %s947 = int_to_ptr.vmem [resolvable:$true] %s946
          %952 = dma.vmem_to_hbm [thread:$0]  %s947, 512, %s945, %s933, 64, 64, 4
        $region44: #{tpu_custom_call.1} parent=27 // pred_fallthru
          _
      $region28: #{tpu_custom_call.1} parent=5 // pred_fallthru
        _
      %p953 = scmp.le.s32.totalorder 2, %s20
      // Predicated region
      $region45: #{tpu_custom_call.1} parent=5 // pred_check
        %p954 = pneg %p953
      $region46: #{tpu_custom_call.1} parent=5 // pred_check_branch
        %956 = sbr.rel (%p954) target = $region48
      $region47: #{tpu_custom_call.1} parent=5 // pred_region
        %s957 = ssub.s32 %s20, 2
        // Predicated region
        $region49: #{tpu_custom_call.1} parent=47 // pred_check
          %p958 = pneg %p96
        $region50: #{tpu_custom_call.1} parent=47 // pred_check_branch
          %960 = sbr.rel (%p958) target = $region52
        $region51: #{tpu_custom_call.1} parent=47 // pred_region
          %s961 = sand.u32 %s81, 1
          %s962 = scalar_lea.sflag [#allocation8], %s961
          %s963 = sand.u32 %s81, 1
          %s964 = smul.addr %s963, 32
          %s965 = scalar_lea.vmem [#allocation11], %s964
          %966 = dma.done %s962, 512
        $region52: #{tpu_custom_call.1} parent=47 // pred_fallthru
          _
      $region48: #{tpu_custom_call.1} parent=5 // pred_fallthru
        _
    $region6: #{tpu_custom_call.1} parent=1 // loop_footer
      %s24 = sadd.s32 1, %s20
    $region7: #{tpu_custom_call.1} parent=1 // loop_footer_branch
      %19 = sbr.rel target = $region3
    $region8: #{tpu_custom_call.1} parent=1 // loop_exit
      _
    %967 = vsyncpa [#allocation7], 1
    %s968 = scalar_lea.sflag [#allocation7], 1
    %969 = vsyncpa %s968, 1
    %970 = vsyncpa [#allocation10], 1
    %971 = vsyncpa [#allocation8], 1
    %s972 = scalar_lea.sflag [#allocation8], 1
    %973 = vsyncpa %s972, 1

</llo_original>
